<compile_context>
chip_gen: v6e
topology: v6e:2x2x1
jax: 0.10.0
libtpu: 0.0.40
codegen_flags: <defaults>
</compile_context>

<pallas_src>
import functools

import jax
import jax.numpy as jnp
from jax import lax
from jax.experimental import pallas as pl
from jax.experimental.pallas import tpu as pltpu


# ---------------------------------------------------------------------------
# Helpers
# ---------------------------------------------------------------------------
def _round_up(x, m):
    return ((x + m - 1) // m) * m


def _pick_tile(padded_dim, candidates):
    for c in candidates:
        if padded_dim % c == 0:
            return c
    return candidates[-1]


# ---------------------------------------------------------------------------
# Pallas kernels: tiled matmul + folded-BN epilogue (+ residual) (+ ReLU)
# ---------------------------------------------------------------------------
def _conv_bn_kernel(x_ref, w_ref, s_ref, b_ref, o_ref, acc_ref, *, relu):
    k = pl.program_id(2)

    @pl.when(k == 0)
    def _():
        acc_ref[...] = jnp.zeros_like(acc_ref)

    acc_ref[...] += jnp.dot(x_ref[...], w_ref[...],
                            preferred_element_type=jnp.float32)

    @pl.when(k == pl.num_programs(2) - 1)
    def _():
        out = acc_ref[...] * s_ref[...] + b_ref[...]
        if relu:
            out = jnp.maximum(out, 0.0)
        o_ref[...] = out.astype(o_ref.dtype)


def _conv_bn_res_kernel(x_ref, w_ref, s_ref, b_ref, r_ref, o_ref, acc_ref, *,
                        relu):
    k = pl.program_id(2)

    @pl.when(k == 0)
    def _():
        acc_ref[...] = jnp.zeros_like(acc_ref)

    acc_ref[...] += jnp.dot(x_ref[...], w_ref[...],
                            preferred_element_type=jnp.float32)

    @pl.when(k == pl.num_programs(2) - 1)
    def _():
        out = (acc_ref[...] * s_ref[...] + b_ref[...]
               + r_ref[...].astype(jnp.float32))
        if relu:
            out = jnp.maximum(out, 0.0)
        o_ref[...] = out.astype(o_ref.dtype)


# ---------------------------------------------------------------------------
# Pallas wrapper
# ---------------------------------------------------------------------------
def fused_matmul_bn(x, w, scale, bias, residual=None, relu=False):
    """out = act((x @ w) * scale + bias [+ residual]) with per-column scale/bias.

    x: (M, K), w: (K, N).  bf16 MXU inputs, f32 accumulation / epilogue.
    """
    M, K = x.shape
    K2, N = w.shape
    assert K == K2

    # Pad to vreg-friendly multiples, then pick tile sizes that divide evenly
    # (bf16 sublane packing => M multiples of 16; lanes => K/N multiples of 128).
    Mp = _round_up(M, 16)
    Kp = _round_up(K, 128)
    Np = _round_up(N, 128)
    tm = _pick_tile(Mp, (512, 256, 128, 64, 32, 16))
    tk = _pick_tile(Kp, (512, 384, 256, 128))
    tn = _pick_tile(Np, (256, 128))

    x_p = jnp.pad(x.astype(jnp.bfloat16), ((0, Mp - M), (0, Kp - K)))
    w_p = jnp.pad(w.astype(jnp.bfloat16), ((0, Kp - K), (0, Np - N)))
    s_p = jnp.pad(scale.reshape(1, N).astype(jnp.float32), ((0, 0), (0, Np - N)))
    b_p = jnp.pad(bias.reshape(1, N).astype(jnp.float32), ((0, 0), (0, Np - N)))

    in_specs = [
        pl.BlockSpec((tm, tk), lambda i, j, k: (i, k)),
        pl.BlockSpec((tk, tn), lambda i, j, k: (k, j)),
        pl.BlockSpec((1, tn), lambda i, j, k: (0, j)),
        pl.BlockSpec((1, tn), lambda i, j, k: (0, j)),
    ]
    args = [x_p, w_p, s_p, b_p]
    bytes_in = 2 * (Mp * Kp + Kp * Np) + 2 * 4 * Np
    if residual is not None:
        r_p = jnp.pad(residual.astype(jnp.bfloat16), ((0, Mp - M), (0, Np - N)))
        in_specs.append(pl.BlockSpec((tm, tn), lambda i, j, k: (i, j)))
        args.append(r_p)
        bytes_in += 2 * Mp * Np
        kernel = functools.partial(_conv_bn_res_kernel, relu=relu)
    else:
        kernel = functools.partial(_conv_bn_kernel, relu=relu)

    out = pl.pallas_call(
        kernel,
        grid=(Mp // tm, Np // tn, Kp // tk),
        in_specs=in_specs,
        out_specs=pl.BlockSpec((tm, tn), lambda i, j, k: (i, j)),
        out_shape=jax.ShapeDtypeStruct((Mp, Np), jnp.float32),
        scratch_shapes=[pltpu.VMEM((tm, tn), jnp.float32)],
        compiler_params=pltpu.CompilerParams(
            dimension_semantics=("parallel", "parallel", "arbitrary")),
        cost_estimate=pl.CostEstimate(
            flops=2 * Mp * Np * Kp,
            transcendentals=0,
            bytes_accessed=bytes_in + 4 * Mp * Np),
    )(*args)
    return out[:M, :N]


# ---------------------------------------------------------------------------
# Glue (im2col patch extraction) in plain JAX
# ---------------------------------------------------------------------------
def _im2col(x, kh, kw, stride, padding):
    # x: (N, H, W, C) NHWC -> (N*Ho*Wo, kh*kw*C)
    N, H, W, C = x.shape
    if padding > 0:
        x = jnp.pad(x, ((0, 0), (padding, padding), (padding, padding), (0, 0)))
    Hp, Wp = H + 2 * padding, W + 2 * padding
    Ho = (Hp - kh) // stride + 1
    Wo = (Wp - kw) // stride + 1
    cols = []
    for i in range(kh):
        for j in range(kw):
            cols.append(x[:, i:i + stride * Ho:stride, j:j + stride * Wo:stride, :])
    cols = jnp.stack(cols, axis=3)                       # (N, Ho, Wo, kh*kw, C)
    return cols.reshape(N * Ho * Wo, kh * kw * C), (N, Ho, Wo)


def conv_bn_act(x, cp, stride, padding, relu, residual=None):
    """conv2d(+bias) + eval-mode BatchNorm [+ residual] [+ ReLU], fused."""
    w = cp["w"]                                          # (KH, KW, Cin, Cout)
    kh, kw, cin, cout = w.shape
    cols, (n, ho, wo) = _im2col(x, kh, kw, stride, padding)
    bn = cp["bn"]
    scale = bn["gamma"] / jnp.sqrt(bn["var"] + 1e-5)
    bias = (cp["b"] - bn["mean"]) * scale + bn["beta"]
    res = None if residual is None else residual.reshape(n * ho * wo, cout)
    out = fused_matmul_bn(cols, w.reshape(kh * kw * cin, cout), scale, bias,
                          residual=res, relu=relu)
    return out.reshape(n, ho, wo, cout)


# ---------------------------------------------------------------------------
# ResidualBlock forward (matches the PyTorch module semantics)
# ---------------------------------------------------------------------------
def residual_block_forward(params, x_nchw, stride=1):
    x = jnp.transpose(x_nchw, (0, 2, 3, 1))              # NCHW -> NHWC
    # conv1: 3x3/stride/pad1 + BN + ReLU
    out = conv_bn_act(x, params["conv1"], stride=stride, padding=1, relu=True)
    # downsample (1x1 conv + BN) on the residual path if present
    if "down" in params:
        residual = conv_bn_act(x, params["down"], stride=stride, padding=0,
                               relu=False)
    else:
        residual = x
    # conv2: 3x3/s1/pad1 + BN, then residual add + ReLU — all fused in Pallas
    out = conv_bn_act(out, params["conv2"], stride=1, padding=1, relu=True,
                      residual=residual)
    return jnp.transpose(out, (0, 3, 1, 2))              # NHWC -> NCHW


# ---------------------------------------------------------------------------
# Pure-JAX reference (for correctness check)
# ---------------------------------------------------------------------------
def _conv_bn_ref(x, cp, stride, padding):
    out = lax.conv_general_dilated(
        x, cp["w"], window_strides=(stride, stride),
        padding=((padding, padding), (padding, padding)),
        dimension_numbers=("NHWC", "HWIO", "NHWC"))
    out = out + cp["b"]
    bn = cp["bn"]
    scale = bn["gamma"] / jnp.sqrt(bn["var"] + 1e-5)
    return (out - bn["mean"]) * scale + bn["beta"]


def residual_block_ref(params, x_nchw, stride=1):
    x = jnp.transpose(x_nchw, (0, 2, 3, 1))
    out = jnp.maximum(_conv_bn_ref(x, params["conv1"], stride, 1), 0.0)
    out = _conv_bn_ref(out, params["conv2"], 1, 1)
    if "down" in params:
        residual = _conv_bn_ref(x, params["down"], stride, 0)
    else:
        residual = x
    out = jnp.maximum(out + residual, 0.0)
    return jnp.transpose(out, (0, 3, 1, 2))


# ---------------------------------------------------------------------------
# Deterministic parameter init (eval-mode BatchNorm)
# ---------------------------------------------------------------------------
def _conv_bn_init(key, kh, kw, cin, cout):
    k = jax.random.split(key, 6)
    w = jax.random.normal(k[0], (kh, kw, cin, cout), jnp.float32) \
        * (2.0 / (kh * kw * cin)) ** 0.5
    b = 0.01 * jax.random.normal(k[1], (cout,), jnp.float32)
    bn = dict(
        gamma=1.0 + 0.1 * jax.random.normal(k[2], (cout,), jnp.float32),
        beta=0.1 * jax.random.normal(k[3], (cout,), jnp.float32),
        mean=0.1 * jax.random.normal(k[4], (cout,), jnp.float32),
        var=1.0 + 0.2 * jax.random.uniform(k[5], (cout,), jnp.float32),
    )
    return dict(w=w, b=b, bn=bn)


def init_block_params(key, cin, cout, stride):
    k = jax.random.split(key, 3)
    p = dict(conv1=_conv_bn_init(k[0], 3, 3, cin, cout),
             conv2=_conv_bn_init(k[1], 3, 3, cout, cout))
    if stride != 1 or cin != cout:
        p["down"] = _conv_bn_init(k[2], 1, 1, cin, cout)
    return p


# ---------------------------------------------------------------------------
if __name__ == "__main__":
    key = jax.random.PRNGKey(0)
    batch, cin, cout, H, W, stride = 2, 64, 128, 16, 16, 2
    kp, kx = jax.random.split(key)
    params = init_block_params(kp, cin, cout, stride)
    x = jax.random.normal(kx, (batch, cin, H, W), jnp.float32)

    fwd = jax.jit(functools.partial(residual_block_forward, stride=stride))
    out = fwd(params, x)
    jax.block_until_ready(out)

    ref = residual_block_ref(params, x, stride)
    assert out.shape == ref.shape == (batch, cout, H // stride, W // stride), out.shape
    assert bool(jnp.all(jnp.isfinite(out)))
    # bf16 MXU inputs => small numeric drift vs. the all-f32 reference.
    err = float(jnp.max(jnp.abs(out - ref)))
    tol = 0.2 + 0.05 * float(jnp.max(jnp.abs(ref)))
    assert err <= tol, (err, tol)
    print("KERNEL_OK")
</pallas_src>

<mosaic_0001>
module attributes {stable_mosaic.version = 11 : i64} {
  func.func @_conv_bn_kernel(%arg0: i32, %arg1: i32, %arg2: i32, %arg3: memref<128x128xbf16, #tpu.memory_space<vmem>>, %arg4: memref<128x128xbf16, #tpu.memory_space<vmem>>, %arg5: memref<1x128xf32, #tpu.memory_space<vmem>>, %arg6: memref<1x128xf32, #tpu.memory_space<vmem>>, %arg7: memref<128x128xf32, #tpu.memory_space<vmem>>, %arg8: memref<128x128xf32, #tpu.memory_space<vmem>>) attributes {dimension_semantics = [#tpu.dimension_semantics<parallel>, #tpu.dimension_semantics<parallel>, #tpu.dimension_semantics<arbitrary>], iteration_bounds = array<i64: 1, 1, 5>, scalar_prefetch = 0 : i64, scratch_operands = 1 : i64, tpu.core_type = #tpu.core_type<tc>, window_params = [{transform_indices = @transform_0, window_bounds = array<i64: 128, 128>}, {transform_indices = @transform_1, window_bounds = array<i64: 128, 128>}, {transform_indices = @transform_2, window_bounds = array<i64: 1, 128>}, {transform_indices = @transform_3, window_bounds = array<i64: 1, 128>}, {transform_indices = @transform_4, window_bounds = array<i64: 128, 128>}]} {
    %c0_i32 = arith.constant 0 : i32
    %0 = arith.cmpi eq, %arg2, %c0_i32 : i32
    %1 = arith.extui %0 : i1 to i32
    %c0_i32_0 = arith.constant 0 : i32
    %2 = arith.cmpi ne, %1, %c0_i32_0 : i32
    scf.if %2 {
      %cst_9 = arith.constant 0.000000e+00 : f32
      %12 = vector.broadcast %cst_9 : f32 to vector<128x128xf32>
      %c0_10 = arith.constant 0 : index
      %c0_11 = arith.constant 0 : index
      %13 = vector.load %arg8[%c0_10, %c0_11] : memref<128x128xf32, #tpu.memory_space<vmem>>, vector<128x128xf32>
      tpu.vector_store %arg8[%c0_10, %c0_11], %12 {strides = array<i32>} : memref<128x128xf32, #tpu.memory_space<vmem>>, vector<128x128xf32>,
    } else {
    }
    %c0 = arith.constant 0 : index
    %c0_1 = arith.constant 0 : index
    %3 = vector.load %arg8[%c0, %c0_1] : memref<128x128xf32, #tpu.memory_space<vmem>>, vector<128x128xf32>
    %c0_2 = arith.constant 0 : index
    %c0_3 = arith.constant 0 : index
    %4 = vector.load %arg3[%c0_2, %c0_3] : memref<128x128xbf16, #tpu.memory_space<vmem>>, vector<128x128xbf16>
    %c0_4 = arith.constant 0 : index
    %c0_5 = arith.constant 0 : index
    %5 = vector.load %arg4[%c0_4, %c0_5] : memref<128x128xbf16, #tpu.memory_space<vmem>>, vector<128x128xbf16>
    %cst = arith.constant dense<0.000000e+00> : vector<128x128xf32>
    %6 = tpu.matmul %4, %5, %cst {dimension_numbers = #tpu.dot_dimension_numbers<[1], [0], [0], [1], [0, 0, 1, 1], [], []>} : vector<128x128xbf16>, vector<128x128xbf16>, vector<128x128xf32> -> vector<128x128xf32>
    %7 = arith.addf %3, %6 : vector<128x128xf32>
    %c0_6 = arith.constant 0 : index
    %c0_7 = arith.constant 0 : index
    %8 = vector.load %arg8[%c0_6, %c0_7] : memref<128x128xf32, #tpu.memory_space<vmem>>, vector<128x128xf32>
    tpu.vector_store %arg8[%c0_6, %c0_7], %7 {strides = array<i32>} : memref<128x128xf32, #tpu.memory_space<vmem>>, vector<128x128xf32>,
    %c4_i32 = arith.constant 4 : i32
    %9 = arith.cmpi eq, %arg2, %c4_i32 : i32
    %10 = arith.extui %9 : i1 to i32
    %c0_i32_8 = arith.constant 0 : i32
    %11 = arith.cmpi ne, %10, %c0_i32_8 : i32
    scf.if %11 {
      %c0_9 = arith.constant 0 : index
      %c0_10 = arith.constant 0 : index
      %12 = vector.load %arg8[%c0_9, %c0_10] : memref<128x128xf32, #tpu.memory_space<vmem>>, vector<128x128xf32>
      %c0_11 = arith.constant 0 : index
      %c0_12 = arith.constant 0 : index
      %13 = vector.load %arg5[%c0_11, %c0_12] : memref<1x128xf32, #tpu.memory_space<vmem>>, vector<1x128xf32>
      %14 = vector.broadcast %13 : vector<1x128xf32> to vector<128x128xf32>
      %15 = arith.mulf %12, %14 : vector<128x128xf32>
      %c0_13 = arith.constant 0 : index
      %c0_14 = arith.constant 0 : index
      %16 = vector.load %arg6[%c0_13, %c0_14] : memref<1x128xf32, #tpu.memory_space<vmem>>, vector<1x128xf32>
      %17 = vector.broadcast %16 : vector<1x128xf32> to vector<128x128xf32>
      %18 = arith.addf %15, %17 : vector<128x128xf32>
      %cst_15 = arith.constant 0.000000e+00 : f32
      %19 = vector.broadcast %cst_15 : f32 to vector<128x128xf32>
      %20 = arith.maximumf %18, %19 : vector<128x128xf32>
      %c0_16 = arith.constant 0 : index
      %c0_17 = arith.constant 0 : index
      %21 = vector.load %arg7[%c0_16, %c0_17] : memref<128x128xf32, #tpu.memory_space<vmem>>, vector<128x128xf32>
      tpu.vector_store %arg7[%c0_16, %c0_17], %20 {strides = array<i32>} : memref<128x128xf32, #tpu.memory_space<vmem>>, vector<128x128xf32>,
    } else {
    }
    return
  }
  func.func @transform_0(%arg0: i32, %arg1: i32, %arg2: i32) -> (i32, i32) {
    %c0_i32 = arith.constant 0 : i32
    return %arg0, %arg2 : i32, i32
  }
  func.func @transform_1(%arg0: i32, %arg1: i32, %arg2: i32) -> (i32, i32) {
    %c0_i32 = arith.constant 0 : i32
    return %arg2, %arg1 : i32, i32
  }
  func.func @transform_2(%arg0: i32, %arg1: i32, %arg2: i32) -> (i32, i32) {
    %c0_i32 = arith.constant 0 : i32
    %c0_i32_0 = arith.constant 0 : i32
    return %c0_i32, %arg1 : i32, i32
  }
  func.func @transform_3(%arg0: i32, %arg1: i32, %arg2: i32) -> (i32, i32) {
    %c0_i32 = arith.constant 0 : i32
    %c0_i32_0 = arith.constant 0 : i32
    return %c0_i32, %arg1 : i32, i32
  }
  func.func @transform_4(%arg0: i32, %arg1: i32, %arg2: i32) -> (i32, i32) {
    %c0_i32 = arith.constant 0 : i32
    return %arg0, %arg1 : i32, i32
  }
}

module attributes {stable_mosaic.version = 11 : i64} {
  func.func @_conv_bn_kernel(%arg0: i32, %arg1: i32, %arg2: i32, %arg3: memref<128x128xbf16, #tpu.memory_space<vmem>>, %arg4: memref<128x128xbf16, #tpu.memory_space<vmem>>, %arg5: memref<1x128xf32, #tpu.memory_space<vmem>>, %arg6: memref<1x128xf32, #tpu.memory_space<vmem>>, %arg7: memref<128x128xf32, #tpu.memory_space<vmem>>, %arg8: memref<128x128xf32, #tpu.memory_space<vmem>>) attributes {dimension_semantics = [#tpu.dimension_semantics<parallel>, #tpu.dimension_semantics<parallel>, #tpu.dimension_semantics<arbitrary>], iteration_bounds = array<i64: 1, 1, 1>, scalar_prefetch = 0 : i64, scratch_operands = 1 : i64, tpu.core_type = #tpu.core_type<tc>, window_params = [{transform_indices = @transform_0, window_bounds = array<i64: 128, 128>}, {transform_indices = @transform_1, window_bounds = array<i64: 128, 128>}, {transform_indices = @transform_2, window_bounds = array<i64: 1, 128>}, {transform_indices = @transform_3, window_bounds = array<i64: 1, 128>}, {transform_indices = @transform_4, window_bounds = array<i64: 128, 128>}]} {
    %c0_i32 = arith.constant 0 : i32
    %0 = arith.cmpi eq, %arg2, %c0_i32 : i32
    %1 = arith.extui %0 : i1 to i32
    %c0_i32_0 = arith.constant 0 : i32
    %2 = arith.cmpi ne, %1, %c0_i32_0 : i32
    scf.if %2 {
      %cst_10 = arith.constant 0.000000e+00 : f32
      %12 = vector.broadcast %cst_10 : f32 to vector<128x128xf32>
      %c0_11 = arith.constant 0 : index
      %c0_12 = arith.constant 0 : index
      %13 = vector.load %arg8[%c0_11, %c0_12] : memref<128x128xf32, #tpu.memory_space<vmem>>, vector<128x128xf32>
      tpu.vector_store %arg8[%c0_11, %c0_12], %12 {strides = array<i32>} : memref<128x128xf32, #tpu.memory_space<vmem>>, vector<128x128xf32>,
    } else {
    }
    %c0 = arith.constant 0 : index
    %c0_1 = arith.constant 0 : index
    %3 = vector.load %arg8[%c0, %c0_1] : memref<128x128xf32, #tpu.memory_space<vmem>>, vector<128x128xf32>
    %c0_2 = arith.constant 0 : index
    %c0_3 = arith.constant 0 : index
    %4 = vector.load %arg3[%c0_2, %c0_3] : memref<128x128xbf16, #tpu.memory_space<vmem>>, vector<128x128xbf16>
    %c0_4 = arith.constant 0 : index
    %c0_5 = arith.constant 0 : index
    %5 = vector.load %arg4[%c0_4, %c0_5] : memref<128x128xbf16, #tpu.memory_space<vmem>>, vector<128x128xbf16>
    %cst = arith.constant dense<0.000000e+00> : vector<128x128xf32>
    %6 = tpu.matmul %4, %5, %cst {dimension_numbers = #tpu.dot_dimension_numbers<[1], [0], [0], [1], [0, 0, 1, 1], [], []>} : vector<128x128xbf16>, vector<128x128xbf16>, vector<128x128xf32> -> vector<128x128xf32>
    %7 = arith.addf %3, %6 : vector<128x128xf32>
    %c0_6 = arith.constant 0 : index
    %c0_7 = arith.constant 0 : index
    %8 = vector.load %arg8[%c0_6, %c0_7] : memref<128x128xf32, #tpu.memory_space<vmem>>, vector<128x128xf32>
    tpu.vector_store %arg8[%c0_6, %c0_7], %7 {strides = array<i32>} : memref<128x128xf32, #tpu.memory_space<vmem>>, vector<128x128xf32>,
    %c0_i32_8 = arith.constant 0 : i32
    %9 = arith.cmpi eq, %arg2, %c0_i32_8 : i32
    %10 = arith.extui %9 : i1 to i32
    %c0_i32_9 = arith.constant 0 : i32
    %11 = arith.cmpi ne, %10, %c0_i32_9 : i32
    scf.if %11 {
      %c0_10 = arith.constant 0 : index
      %c0_11 = arith.constant 0 : index
      %12 = vector.load %arg8[%c0_10, %c0_11] : memref<128x128xf32, #tpu.memory_space<vmem>>, vector<128x128xf32>
      %c0_12 = arith.constant 0 : index
      %c0_13 = arith.constant 0 : index
      %13 = vector.load %arg5[%c0_12, %c0_13] : memref<1x128xf32, #tpu.memory_space<vmem>>, vector<1x128xf32>
      %14 = vector.broadcast %13 : vector<1x128xf32> to vector<128x128xf32>
      %15 = arith.mulf %12, %14 : vector<128x128xf32>
      %c0_14 = arith.constant 0 : index
      %c0_15 = arith.constant 0 : index
      %16 = vector.load %arg6[%c0_14, %c0_15] : memref<1x128xf32, #tpu.memory_space<vmem>>, vector<1x128xf32>
      %17 = vector.broadcast %16 : vector<1x128xf32> to vector<128x128xf32>
      %18 = arith.addf %15, %17 : vector<128x128xf32>
      %c0_16 = arith.constant 0 : index
      %c0_17 = arith.constant 0 : index
      %19 = vector.load %arg7[%c0_16, %c0_17] : memref<128x128xf32, #tpu.memory_space<vmem>>, vector<128x128xf32>
      tpu.vector_store %arg7[%c0_16, %c0_17], %18 {strides = array<i32>} : memref<128x128xf32, #tpu.memory_space<vmem>>, vector<128x128xf32>,
    } else {
    }
    return
  }
  func.func @transform_0(%arg0: i32, %arg1: i32, %arg2: i32) -> (i32, i32) {
    %c0_i32 = arith.constant 0 : i32
    return %arg0, %arg2 : i32, i32
  }
  func.func @transform_1(%arg0: i32, %arg1: i32, %arg2: i32) -> (i32, i32) {
    %c0_i32 = arith.constant 0 : i32
    return %arg2, %arg1 : i32, i32
  }
  func.func @transform_2(%arg0: i32, %arg1: i32, %arg2: i32) -> (i32, i32) {
    %c0_i32 = arith.constant 0 : i32
    %c0_i32_0 = arith.constant 0 : i32
    return %c0_i32, %arg1 : i32, i32
  }
  func.func @transform_3(%arg0: i32, %arg1: i32, %arg2: i32) -> (i32, i32) {
    %c0_i32 = arith.constant 0 : i32
    %c0_i32_0 = arith.constant 0 : i32
    return %c0_i32, %arg1 : i32, i32
  }
  func.func @transform_4(%arg0: i32, %arg1: i32, %arg2: i32) -> (i32, i32) {
    %c0_i32 = arith.constant 0 : i32
    return %arg0, %arg1 : i32, i32
  }
}

module attributes {stable_mosaic.version = 11 : i64} {
  func.func @_conv_bn_res_kernel(%arg0: i32, %arg1: i32, %arg2: i32, %arg3: memref<128x384xbf16, #tpu.memory_space<vmem>>, %arg4: memref<384x128xbf16, #tpu.memory_space<vmem>>, %arg5: memref<1x128xf32, #tpu.memory_space<vmem>>, %arg6: memref<1x128xf32, #tpu.memory_space<vmem>>, %arg7: memref<128x128xbf16, #tpu.memory_space<vmem>>, %arg8: memref<128x128xf32, #tpu.memory_space<vmem>>, %arg9: memref<128x128xf32, #tpu.memory_space<vmem>>) attributes {dimension_semantics = [#tpu.dimension_semantics<parallel>, #tpu.dimension_semantics<parallel>, #tpu.dimension_semantics<arbitrary>], iteration_bounds = array<i64: 1, 1, 3>, scalar_prefetch = 0 : i64, scratch_operands = 1 : i64, tpu.core_type = #tpu.core_type<tc>, window_params = [{transform_indices = @transform_0, window_bounds = array<i64: 128, 384>}, {transform_indices = @transform_1, window_bounds = array<i64: 384, 128>}, {transform_indices = @transform_2, window_bounds = array<i64: 1, 128>}, {transform_indices = @transform_3, window_bounds = array<i64: 1, 128>}, {transform_indices = @transform_4, window_bounds = array<i64: 128, 128>}, {transform_indices = @transform_5, window_bounds = array<i64: 128, 128>}]} {
    %c0_i32 = arith.constant 0 : i32
    %0 = arith.cmpi eq, %arg2, %c0_i32 : i32
    %1 = arith.extui %0 : i1 to i32
    %c0_i32_0 = arith.constant 0 : i32
    %2 = arith.cmpi ne, %1, %c0_i32_0 : i32
    scf.if %2 {
      %cst_9 = arith.constant 0.000000e+00 : f32
      %12 = vector.broadcast %cst_9 : f32 to vector<128x128xf32>
      %c0_10 = arith.constant 0 : index
      %c0_11 = arith.constant 0 : index
      %13 = vector.load %arg9[%c0_10, %c0_11] : memref<128x128xf32, #tpu.memory_space<vmem>>, vector<128x128xf32>
      tpu.vector_store %arg9[%c0_10, %c0_11], %12 {strides = array<i32>} : memref<128x128xf32, #tpu.memory_space<vmem>>, vector<128x128xf32>,
    } else {
    }
    %c0 = arith.constant 0 : index
    %c0_1 = arith.constant 0 : index
    %3 = vector.load %arg9[%c0, %c0_1] : memref<128x128xf32, #tpu.memory_space<vmem>>, vector<128x128xf32>
    %c0_2 = arith.constant 0 : index
    %c0_3 = arith.constant 0 : index
    %4 = vector.load %arg3[%c0_2, %c0_3] : memref<128x384xbf16, #tpu.memory_space<vmem>>, vector<128x384xbf16>
    %c0_4 = arith.constant 0 : index
    %c0_5 = arith.constant 0 : index
    %5 = vector.load %arg4[%c0_4, %c0_5] : memref<384x128xbf16, #tpu.memory_space<vmem>>, vector<384x128xbf16>
    %cst = arith.constant dense<0.000000e+00> : vector<128x128xf32>
    %6 = tpu.matmul %4, %5, %cst {dimension_numbers = #tpu.dot_dimension_numbers<[1], [0], [0], [1], [0, 0, 1, 1], [], []>} : vector<128x384xbf16>, vector<384x128xbf16>, vector<128x128xf32> -> vector<128x128xf32>
    %7 = arith.addf %3, %6 : vector<128x128xf32>
    %c0_6 = arith.constant 0 : index
    %c0_7 = arith.constant 0 : index
    %8 = vector.load %arg9[%c0_6, %c0_7] : memref<128x128xf32, #tpu.memory_space<vmem>>, vector<128x128xf32>
    tpu.vector_store %arg9[%c0_6, %c0_7], %7 {strides = array<i32>} : memref<128x128xf32, #tpu.memory_space<vmem>>, vector<128x128xf32>,
    %c2_i32 = arith.constant 2 : i32
    %9 = arith.cmpi eq, %arg2, %c2_i32 : i32
    %10 = arith.extui %9 : i1 to i32
    %c0_i32_8 = arith.constant 0 : i32
    %11 = arith.cmpi ne, %10, %c0_i32_8 : i32
    scf.if %11 {
      %c0_9 = arith.constant 0 : index
      %c0_10 = arith.constant 0 : index
      %12 = vector.load %arg9[%c0_9, %c0_10] : memref<128x128xf32, #tpu.memory_space<vmem>>, vector<128x128xf32>
      %c0_11 = arith.constant 0 : index
      %c0_12 = arith.constant 0 : index
      %13 = vector.load %arg5[%c0_11, %c0_12] : memref<1x128xf32, #tpu.memory_space<vmem>>, vector<1x128xf32>
      %14 = vector.broadcast %13 : vector<1x128xf32> to vector<128x128xf32>
      %15 = arith.mulf %12, %14 : vector<128x128xf32>
      %c0_13 = arith.constant 0 : index
      %c0_14 = arith.constant 0 : index
      %16 = vector.load %arg6[%c0_13, %c0_14] : memref<1x128xf32, #tpu.memory_space<vmem>>, vector<1x128xf32>
      %17 = vector.broadcast %16 : vector<1x128xf32> to vector<128x128xf32>
      %18 = arith.addf %15, %17 : vector<128x128xf32>
      %c0_15 = arith.constant 0 : index
      %c0_16 = arith.constant 0 : index
      %19 = vector.load %arg7[%c0_15, %c0_16] : memref<128x128xbf16, #tpu.memory_space<vmem>>, vector<128x128xbf16>
      %20 = arith.extf %19 : vector<128x128xbf16> to vector<128x128xf32>
      %21 = arith.addf %18, %20 : vector<128x128xf32>
      %cst_17 = arith.constant 0.000000e+00 : f32
      %22 = vector.broadcast %cst_17 : f32 to vector<128x128xf32>
      %23 = arith.maximumf %21, %22 : vector<128x128xf32>
      %c0_18 = arith.constant 0 : index
      %c0_19 = arith.constant 0 : index
      %24 = vector.load %arg8[%c0_18, %c0_19] : memref<128x128xf32, #tpu.memory_space<vmem>>, vector<128x128xf32>
      tpu.vector_store %arg8[%c0_18, %c0_19], %23 {strides = array<i32>} : memref<128x128xf32, #tpu.memory_space<vmem>>, vector<128x128xf32>,
    } else {
    }
    return
  }
  func.func @transform_0(%arg0: i32, %arg1: i32, %arg2: i32) -> (i32, i32) {
    %c0_i32 = arith.constant 0 : i32
    return %arg0, %arg2 : i32, i32
  }
  func.func @transform_1(%arg0: i32, %arg1: i32, %arg2: i32) -> (i32, i32) {
    %c0_i32 = arith.constant 0 : i32
    return %arg2, %arg1 : i32, i32
  }
  func.func @transform_2(%arg0: i32, %arg1: i32, %arg2: i32) -> (i32, i32) {
    %c0_i32 = arith.constant 0 : i32
    %c0_i32_0 = arith.constant 0 : i32
    return %c0_i32, %arg1 : i32, i32
  }
  func.func @transform_3(%arg0: i32, %arg1: i32, %arg2: i32) -> (i32, i32) {
    %c0_i32 = arith.constant 0 : i32
    %c0_i32_0 = arith.constant 0 : i32
    return %c0_i32, %arg1 : i32, i32
  }
  func.func @transform_4(%arg0: i32, %arg1: i32, %arg2: i32) -> (i32, i32) {
    %c0_i32 = arith.constant 0 : i32
    return %arg0, %arg1 : i32, i32
  }
  func.func @transform_5(%arg0: i32, %arg1: i32, %arg2: i32) -> (i32, i32) {
    %c0_i32 = arith.constant 0 : i32
    return %arg0, %arg1 : i32, i32
  }
}

</mosaic_0001>

<llo_original>
// kernel: residual_block_forward.3
$region0: #{residual_block_forward.3}
  #allocation0 [shape = 'u32[]', space=smem, size = 0x4, offset = 0x4, fixed_abs, tag = 'smem constant byte address 0x4 - core index']
  #allocation1 [shape = 'u32[144,128]{1,0:T(1,128)}', space=vmem, size = 0x12000, scoped, tag = 'internal scratch']
  #allocation2 [shape = 'f32[128,128]{1,0:T(8,128)}', space=vmem, size = 0x10000, scoped, tag = 'scratch operand']
  %s0 = inlined_call_operand.vmem [shape: bf16[128,640], index: 0, kind: input, shape index: {}]
  %s1 = inlined_call_operand.vmem [shape: bf16[640,128], index: 1, kind: input, shape index: {}]
  %s2 = inlined_call_operand.vmem [shape: f32[1,128], index: 2, kind: input, shape index: {}]
  %s3 = inlined_call_operand.vmem [shape: f32[1,128], index: 3, kind: input, shape index: {}]
  %s4 = inlined_call_operand.vmem [shape: f32[128,128], index: 4, kind: output, shape index: {}]
  %s5 = sld [smem:[#allocation0]]
  $region98: #{residual_block_forward.3} parent=0
    _
  %s7 = ssub.s32 1, %s5
  %s8 = scalar_select 0, %s7, %s5
  $region1: #{residual_block_forward.3} parent=0
    #allocation3 [shape = 'u8[65536]{0}', space=vmem, size = 0x10000, scoped, tag = 'input window, operand 0']
    loop: start=0, step=1, limit=7
    $region2: #{residual_block_forward.3} parent=1 // loop_pre_header
      _
    $region3: #{residual_block_forward.3} parent=1 // loop_header
      %s10 = sphi 0, %s14
      %p11 = scmp.ge.s32.totalorder %s10, 7
      %s17 = sphi 0, %s36
      %s18 = sphi 0, %s32
      %s19 = sphi 0, %s28
      %s20 = sphi 0, %s17
      %s21 = sphi 0, %s18
      %s22 = sphi 0, %s19
      %s23 = sphi 0, %s20
      %s24 = sphi 0, %s21
      %s25 = sphi 0, %s22
      %s41 = sphi 0, %s43
      %s44 = sphi 0, %s41
      %s45 = sphi 0, %s44
      %s61 = sphi 0, %s45
      %s69 = sphi 0, %s71
      %s72 = sphi 0, %s69
      %s73 = sphi 0, %s72
      %s89 = sphi 0, %s73
      %s95 = sphi 0, %s97
      %s98 = sphi 0, %s95
      %s99 = sphi 0, %s98
      %s115 = sphi 0, %s99
      %s121 = sphi 0, %s123
      %s124 = sphi 0, %s121
      %s125 = sphi 0, %s124
      %s141 = sphi 0, %s125
      %s149 = sphi 0, %s151
      %s152 = sphi 0, %s149
      %s153 = sphi 0, %s152
      %s169 = sphi 0, %s153
    $region4: #{residual_block_forward.3} parent=1 // loop_header_branch
      %13 = sbr.rel (%p11) target = $region8
    $region5: #{residual_block_forward.3} parent=1 // loop_body
      %s15 = ssub.s32 %s10, 1
      %s16 = ssub.s32 %s10, 2
      %s26 = sadd.s32 1, %s19
      %p27 = scmp.ge.s32.totalorder %s26, 5
      %s28 = scalar_select %p27, 0, %s26
      %s29 = sadd.s32 1, %s18
      %s30 = scalar_select %p27, %s29, %s18
      %p31 = scmp.ge.s32.totalorder %s30, 1
      %s32 = scalar_select %p31, 0, %s30
      %s33 = sadd.s32 1, %s17
      %s34 = scalar_select %p31, %s33, %s17
      %p35 = scmp.ge.s32.totalorder %s34, 1
      %s36 = scalar_select %p35, 0, %s34
      %s37 = ssub.s32 %s17, %s36
      %s38 = ssub.s32 %s19, %s28
      %s39 = sor.u32 %s37, %s38
      %p40 = scmp.eq.s32.totalorder %s39, 0
      %s42 = sadd.s32 %s41, 1
      %s43 = scalar_select %p40, %s41, %s42
      %p46 = pneg %p40
      %p47 = scmp.eq.s32.totalorder %s10, 4
      %p48 = por %p46, %p47
      %p49 = scmp.ne.s32.totalorder %s41, %s44
      %p50 = scmp.eq.s32.totalorder %s10, 0
      %p51 = por %p49, %p50
      %p52 = scmp.ne.s32.totalorder %s41, %s44
      %p53 = scmp.eq.s32.totalorder %s15, 4
      %p54 = por %p52, %p53
      %p55 = scmp.ne.s32.totalorder %s44, %s45
      %p56 = scmp.eq.s32.totalorder %s15, 0
      %p57 = por %p55, %p56
      %p58 = scmp.ne.s32.totalorder %s44, %s45
      %p59 = scmp.eq.s32.totalorder %s16, 4
      %p60 = por %p58, %p59
      %p62 = scmp.ne.s32.totalorder %s45, %s61
      %p63 = scmp.eq.s32.totalorder %s16, 0
      %p64 = por %p62, %p63
      %s65 = ssub.s32 %s19, %s28
      %s66 = ssub.s32 %s18, %s32
      %s67 = sor.u32 %s65, %s66
      %p68 = scmp.eq.s32.totalorder %s67, 0
      %s70 = sadd.s32 %s69, 1
      %s71 = scalar_select %p68, %s69, %s70
      %p74 = pneg %p68
      %p75 = scmp.eq.s32.totalorder %s10, 4
      %p76 = por %p74, %p75
      %p77 = scmp.ne.s32.totalorder %s69, %s72
      %p78 = scmp.eq.s32.totalorder %s10, 0
      %p79 = por %p77, %p78
      %p80 = scmp.ne.s32.totalorder %s69, %s72
      %p81 = scmp.eq.s32.totalorder %s15, 4
      %p82 = por %p80, %p81
      %p83 = scmp.ne.s32.totalorder %s72, %s73
      %p84 = scmp.eq.s32.totalorder %s15, 0
      %p85 = por %p83, %p84
      %p86 = scmp.ne.s32.totalorder %s72, %s73
      %p87 = scmp.eq.s32.totalorder %s16, 4
      %p88 = por %p86, %p87
      %p90 = scmp.ne.s32.totalorder %s73, %s89
      %p91 = scmp.eq.s32.totalorder %s16, 0
      %p92 = por %p90, %p91
      %s93 = ssub.s32 %s18, %s32
      %p94 = scmp.eq.s32.totalorder %s93, 0
      %s96 = sadd.s32 %s95, 1
      %s97 = scalar_select %p94, %s95, %s96
      %p100 = pneg %p94
      %p101 = scmp.eq.s32.totalorder %s10, 4
      %p102 = por %p100, %p101
      %p103 = scmp.ne.s32.totalorder %s95, %s98
      %p104 = scmp.eq.s32.totalorder %s10, 0
      %p105 = por %p103, %p104
      %p106 = scmp.ne.s32.totalorder %s95, %s98
      %p107 = scmp.eq.s32.totalorder %s15, 4
      %p108 = por %p106, %p107
      %p109 = scmp.ne.s32.totalorder %s98, %s99
      %p110 = scmp.eq.s32.totalorder %s15, 0
      %p111 = por %p109, %p110
      %p112 = scmp.ne.s32.totalorder %s98, %s99
      %p113 = scmp.eq.s32.totalorder %s16, 4
      %p114 = por %p112, %p113
      %p116 = scmp.ne.s32.totalorder %s99, %s115
      %p117 = scmp.eq.s32.totalorder %s16, 0
      %p118 = por %p116, %p117
      %s119 = ssub.s32 %s18, %s32
      %p120 = scmp.eq.s32.totalorder %s119, 0
      %s122 = sadd.s32 %s121, 1
      %s123 = scalar_select %p120, %s121, %s122
      %p126 = pneg %p120
      %p127 = scmp.eq.s32.totalorder %s10, 4
      %p128 = por %p126, %p127
      %p129 = scmp.ne.s32.totalorder %s121, %s124
      %p130 = scmp.eq.s32.totalorder %s10, 0
      %p131 = por %p129, %p130
      %p132 = scmp.ne.s32.totalorder %s121, %s124
      %p133 = scmp.eq.s32.totalorder %s15, 4
      %p134 = por %p132, %p133
      %p135 = scmp.ne.s32.totalorder %s124, %s125
      %p136 = scmp.eq.s32.totalorder %s15, 0
      %p137 = por %p135, %p136
      %p138 = scmp.ne.s32.totalorder %s124, %s125
      %p139 = scmp.eq.s32.totalorder %s16, 4
      %p140 = por %p138, %p139
      %p142 = scmp.ne.s32.totalorder %s125, %s141
      %p143 = scmp.eq.s32.totalorder %s16, 0
      %p144 = por %p142, %p143
      %s145 = ssub.s32 %s17, %s36
      %s146 = ssub.s32 %s18, %s32
      %s147 = sor.u32 %s145, %s146
      %p148 = scmp.eq.s32.totalorder %s147, 0
      %s150 = sadd.s32 %s149, 1
      %s151 = scalar_select %p148, %s149, %s150
      %p154 = pneg %p148
      %p155 = scmp.eq.s32.totalorder %s10, 4
      %p156 = por %p154, %p155
      %p157 = scmp.ne.s32.totalorder %s149, %s152
      %p158 = scmp.eq.s32.totalorder %s10, 0
      %p159 = por %p157, %p158
      %p160 = scmp.ne.s32.totalorder %s149, %s152
      %p161 = scmp.eq.s32.totalorder %s15, 4
      %p162 = por %p160, %p161
      %p163 = scmp.ne.s32.totalorder %s152, %s153
      %p164 = scmp.eq.s32.totalorder %s15, 0
      %p165 = por %p163, %p164
      %p166 = scmp.ne.s32.totalorder %s152, %s153
      %p167 = scmp.eq.s32.totalorder %s16, 4
      %p168 = por %p166, %p167
      %p170 = scmp.ne.s32.totalorder %s153, %s169
      %p171 = scmp.eq.s32.totalorder %s16, 0
      %p172 = por %p170, %p171
      %p173 = scmp.le.s32.totalorder 1, %s10
      %p174 = scmp.lt.s32.totalorder %s10, 6
      %p175 = pnand %p173, %p174
      %p176 = pneg %p175
      // Predicated region
      $region9: #{residual_block_forward.3} parent=5 // pred_check
        _
      $region10: #{residual_block_forward.3} parent=5 // pred_check_branch
        %178 = sbr.rel (%p175) target = $region12
      $region11: #{residual_block_forward.3} parent=5 // pred_region
        %s179 = ssub.s32 %s10, 1
        // Predicated region
        $region13: #{residual_block_forward.3} parent=11 // pred_check
          %p180 = pneg %p111
        $region14: #{residual_block_forward.3} parent=11 // pred_check_branch
          %182 = sbr.rel (%p180) target = $region16
        $region15: #{residual_block_forward.3} parent=11 // pred_region
          %p183 = scmp.lt.s32.totalorder %s21, 0
          %s184 = scalar_select %p183, %s21, 0
          %s185 = scalar_lea.vmem %s2, %s184
        $region16: #{residual_block_forward.3} parent=11 // pred_fallthru
          _
        // Predicated region
        $region17: #{residual_block_forward.3} parent=11 // pred_check
          %p186 = pneg %p137
        $region18: #{residual_block_forward.3} parent=11 // pred_check_branch
          %188 = sbr.rel (%p186) target = $region20
        $region19: #{residual_block_forward.3} parent=11 // pred_region
          %p189 = scmp.lt.s32.totalorder %s21, 0
          %s190 = scalar_select %p189, %s21, 0
          %s191 = scalar_lea.vmem %s3, %s190
        $region20: #{residual_block_forward.3} parent=11 // pred_fallthru
          _
      $region12: #{residual_block_forward.3} parent=5 // pred_fallthru
        _
      %p192 = scmp.lt.s32.totalorder %s10, 5
      // Predicated region
      $region21: #{residual_block_forward.3} parent=5 // pred_check
        %p193 = pneg %p192
      $region22: #{residual_block_forward.3} parent=5 // pred_check_branch
        %195 = sbr.rel (%p193) target = $region24
      $region23: #{residual_block_forward.3} parent=5 // pred_region
        // Predicated region
        $region25: #{residual_block_forward.3} parent=23 // pred_check
          %p196 = pneg %p51
        $region26: #{residual_block_forward.3} parent=23 // pred_check_branch
          %198 = sbr.rel (%p196) target = $region28
        $region27: #{residual_block_forward.3} parent=23 // pred_region
          %s199 = sand.u32 %s41, 1
          %s200 = sand.u32 %s41, 1
          %s201 = smul.addr %s200, 64
          %s202 = scalar_lea.vmem [#allocation3], %s201
          %s203 = smul.u32 16, %s17
          %s204 = smul.addr %s203, 5
          %s205 = sadd.s32 %s19, %s204
          %s206 = smul.addr %s205, 4
          %s207 = scalar_lea.vmem %s0, %s206
          // Predicated region
          $region29: #{residual_block_forward.3} parent=27 // pred_check
            _
          $region30: #{residual_block_forward.3} parent=27 // pred_check_branch
            %209 = sbr.rel (0) target = $region32
          $region31: #{residual_block_forward.3} parent=27 // pred_region
            // Predicated region
            $region33: #{residual_block_forward.3} parent=31 // pred_check
              _
            $region34: #{residual_block_forward.3} parent=31 // pred_check_branch
              %211 = sbr.rel target = $region36
            $region35: #{residual_block_forward.3} parent=31 // pred_region
              // Predicated region
              $region48: #{residual_block_forward.3} parent=35 // pred_check
                _
              $region49: #{residual_block_forward.3} parent=35 // pred_check_branch
                %257 = sbr.rel (0) target = $region51
              $region50: #{residual_block_forward.3} parent=35 // pred_region
                loop: start=0, step=1, limit=1
                $region52: #{residual_block_forward.3} parent=50 // loop_pre_header
                  _
                $region53: #{residual_block_forward.3} parent=50 // loop_header
                  %s259 = sphi 0, %s263
                  %p260 = scmp.ge.s32.totalorder %s259, 1
                  %s264 = sphi %s207, %s207
                  %s265 = sphi %s202, %s202
                $region54: #{residual_block_forward.3} parent=50 // loop_header_branch
                  %262 = sbr.rel (%p260) target = $region58
                $region55: #{residual_block_forward.3} parent=50 // loop_body
                  _
                $region56: #{residual_block_forward.3} parent=50 // loop_footer
                  %s263 = sadd.s32 1, %s259
                $region57: #{residual_block_forward.3} parent=50 // loop_footer_branch
                  %258 = sbr.rel target = $region53
                $region58: #{residual_block_forward.3} parent=50 // loop_exit
                  _
                %s267 = ssub.s32 16, 1
                loop: start=0, step=1, limit=1
                $region59: #{residual_block_forward.3} parent=50 // loop_pre_header
                  _
                $region60: #{residual_block_forward.3} parent=50 // loop_header
                  %s269 = sphi 0, %s273
                  %p270 = scmp.ge.s32.totalorder %s269, 1
                  %s274 = sphi %s207, %s207
                  %s275 = sphi %s202, %s202
                $region61: #{residual_block_forward.3} parent=50 // loop_header_branch
                  %272 = sbr.rel (%p270) target = $region65
                $region62: #{residual_block_forward.3} parent=50 // loop_body
                  %v276 = vld [vmem:[%s274] sm:%s267]
                  %277 = vst [vmem:[%s275] sm:%s267] %v276
                  %v278 = vld [vmem:[%s274 + $0x14] sm:%s267]
                  %279 = vst [vmem:[%s275 + $0x4] sm:%s267] %v278
                  %v280 = vld [vmem:[%s274 + $0x28] sm:%s267]
                  %281 = vst [vmem:[%s275 + $0x8] sm:%s267] %v280
                  %v282 = vld [vmem:[%s274 + $0x3c] sm:%s267]
                  %283 = vst [vmem:[%s275 + $0xc] sm:%s267] %v282
                  %v284 = vld [vmem:[%s274 + $0x50] sm:%s267]
                  %285 = vst [vmem:[%s275 + $0x10] sm:%s267] %v284
                  %v286 = vld [vmem:[%s274 + $0x64] sm:%s267]
                  %287 = vst [vmem:[%s275 + $0x14] sm:%s267] %v286
                  %v288 = vld [vmem:[%s274 + $0x78] sm:%s267]
                  %289 = vst [vmem:[%s275 + $0x18] sm:%s267] %v288
                  %v290 = vld [vmem:[%s274 + $0x8c] sm:%s267]
                  %291 = vst [vmem:[%s275 + $0x1c] sm:%s267] %v290
                  %v292 = vld [vmem:[%s274 + $0xa0] sm:%s267]
                  %293 = vst [vmem:[%s275 + $0x20] sm:%s267] %v292
                  %v294 = vld [vmem:[%s274 + $0xb4] sm:%s267]
                  %295 = vst [vmem:[%s275 + $0x24] sm:%s267] %v294
                  %v296 = vld [vmem:[%s274 + $0xc8] sm:%s267]
                  %297 = vst [vmem:[%s275 + $0x28] sm:%s267] %v296
                  %v298 = vld [vmem:[%s274 + $0xdc] sm:%s267]
                  %299 = vst [vmem:[%s275 + $0x2c] sm:%s267] %v298
                  %v300 = vld [vmem:[%s274 + $0xf0] sm:%s267]
                  %301 = vst [vmem:[%s275 + $0x30] sm:%s267] %v300
                  %v302 = vld [vmem:[%s274 + $0x104] sm:%s267]
                  %303 = vst [vmem:[%s275 + $0x34] sm:%s267] %v302
                  %v304 = vld [vmem:[%s274 + $0x118] sm:%s267]
                  %305 = vst [vmem:[%s275 + $0x38] sm:%s267] %v304
                  %v306 = vld [vmem:[%s274 + $0x12c] sm:%s267]
                  %307 = vst [vmem:[%s275 + $0x3c] sm:%s267] %v306
                $region63: #{residual_block_forward.3} parent=50 // loop_footer
                  %s273 = sadd.s32 1, %s269
                $region64: #{residual_block_forward.3} parent=50 // loop_footer_branch
                  %268 = sbr.rel target = $region60
                $region65: #{residual_block_forward.3} parent=50 // loop_exit
                  _
              $region51: #{residual_block_forward.3} parent=35 // pred_fallthru
                _
            $region36: #{residual_block_forward.3} parent=31 // pred_fallthru
              _
            // Predicated region
            $region37: #{residual_block_forward.3} parent=31 // pred_check
              _
            $region38: #{residual_block_forward.3} parent=31 // pred_check_branch
              %213 = sbr.rel (0) target = $region40
            $region39: #{residual_block_forward.3} parent=31 // pred_region
              %s215 = ssub.s32 16, 1
              loop: start=0, step=1, limit=1
              $region41: #{residual_block_forward.3} parent=39 // loop_pre_header
                _
              $region42: #{residual_block_forward.3} parent=39 // loop_header
                %s217 = sphi 0, %s221
                %p218 = scmp.ge.s32.totalorder %s217, 1
                %s222 = sphi %s207, %s207
                %s223 = sphi %s202, %s202
              $region43: #{residual_block_forward.3} parent=39 // loop_header_branch
                %220 = sbr.rel (%p218) target = $region47
              $region44: #{residual_block_forward.3} parent=39 // loop_body
                %v224 = vld [vmem:[%s222] sm:%s215]
                %225 = vst [vmem:[%s223] sm:%s215] %v224
                %v226 = vld [vmem:[%s222 + $0x14] sm:%s215]
                %227 = vst [vmem:[%s223 + $0x4] sm:%s215] %v226
                %v228 = vld [vmem:[%s222 + $0x28] sm:%s215]
                %229 = vst [vmem:[%s223 + $0x8] sm:%s215] %v228
                %v230 = vld [vmem:[%s222 + $0x3c] sm:%s215]
                %231 = vst [vmem:[%s223 + $0xc] sm:%s215] %v230
                %v232 = vld [vmem:[%s222 + $0x50] sm:%s215]
                %233 = vst [vmem:[%s223 + $0x10] sm:%s215] %v232
                %v234 = vld [vmem:[%s222 + $0x64] sm:%s215]
                %235 = vst [vmem:[%s223 + $0x14] sm:%s215] %v234
                %v236 = vld [vmem:[%s222 + $0x78] sm:%s215]
                %237 = vst [vmem:[%s223 + $0x18] sm:%s215] %v236
                %v238 = vld [vmem:[%s222 + $0x8c] sm:%s215]
                %239 = vst [vmem:[%s223 + $0x1c] sm:%s215] %v238
                %v240 = vld [vmem:[%s222 + $0xa0] sm:%s215]
                %241 = vst [vmem:[%s223 + $0x20] sm:%s215] %v240
                %v242 = vld [vmem:[%s222 + $0xb4] sm:%s215]
                %243 = vst [vmem:[%s223 + $0x24] sm:%s215] %v242
                %v244 = vld [vmem:[%s222 + $0xc8] sm:%s215]
                %245 = vst [vmem:[%s223 + $0x28] sm:%s215] %v244
                %v246 = vld [vmem:[%s222 + $0xdc] sm:%s215]
                %247 = vst [vmem:[%s223 + $0x2c] sm:%s215] %v246
                %v248 = vld [vmem:[%s222 + $0xf0] sm:%s215]
                %249 = vst [vmem:[%s223 + $0x30] sm:%s215] %v248
                %v250 = vld [vmem:[%s222 + $0x104] sm:%s215]
                %251 = vst [vmem:[%s223 + $0x34] sm:%s215] %v250
                %v252 = vld [vmem:[%s222 + $0x118] sm:%s215]
                %253 = vst [vmem:[%s223 + $0x38] sm:%s215] %v252
                %v254 = vld [vmem:[%s222 + $0x12c] sm:%s215]
                %255 = vst [vmem:[%s223 + $0x3c] sm:%s215] %v254
              $region45: #{residual_block_forward.3} parent=39 // loop_footer
                %s221 = sadd.s32 1, %s217
              $region46: #{residual_block_forward.3} parent=39 // loop_footer_branch
                %216 = sbr.rel target = $region42
              $region47: #{residual_block_forward.3} parent=39 // loop_exit
                _
            $region40: #{residual_block_forward.3} parent=31 // pred_fallthru
              _
          $region32: #{residual_block_forward.3} parent=27 // pred_fallthru
            _
          %308 = vnop
        $region28: #{residual_block_forward.3} parent=23 // pred_fallthru
          _
        // Predicated region
        $region66: #{residual_block_forward.3} parent=23 // pred_check
          %p309 = pneg %p79
        $region67: #{residual_block_forward.3} parent=23 // pred_check_branch
          %311 = sbr.rel (%p309) target = $region69
        $region68: #{residual_block_forward.3} parent=23 // pred_region
          %s312 = smul.u32 16, %s19
          %p313 = scmp.lt.s32.totalorder %s312, 79
          %s314 = scalar_select %p313, %s312, 79
          %p315 = scmp.lt.s32.totalorder %s18, 0
          %s316 = scalar_select %p315, %s18, 0
          %s317 = sadd.s32 %s316, %s314
          %s318 = smul.addr %s317, 4
          %s319 = scalar_lea.vmem %s1, %s318
          %s320 = smul.u32 16, %s19
        $region69: #{residual_block_forward.3} parent=23 // pred_fallthru
          _
      $region24: #{residual_block_forward.3} parent=5 // pred_fallthru
        _
      %p321 = scmp.le.s32.totalorder 1, %s10
      %p322 = scmp.lt.s32.totalorder %s10, 6
      %p323 = pnand %p321, %p322
      %p324 = pneg %p323
      // Predicated region
      $region70: #{residual_block_forward.3} parent=5 // pred_check
        _
      $region71: #{residual_block_forward.3} parent=5 // pred_check_branch
        %326 = sbr.rel (%p323) target = $region73
      $region72: #{residual_block_forward.3} parent=5 // pred_region
        %s327 = ssub.s32 %s10, 1
        %s328 = sand.u32 %s44, 1
        %s329 = sand.u32 %s44, 1
        %s330 = smul.addr %s329, 64
        %s331 = scalar_lea.vmem [#allocation3], %s330
        // Predicated region
        $region74: #{residual_block_forward.3} parent=72 // pred_check
          %p332 = pneg %p57
        $region75: #{residual_block_forward.3} parent=72 // pred_check_branch
          %334 = sbr.rel (%p332) target = $region77
        $region76: #{residual_block_forward.3} parent=72 // pred_region
          _
        $region77: #{residual_block_forward.3} parent=72 // pred_fallthru
          _
        %s335 = sand.u32 %s44, 1
        %s336 = sand.u32 %s44, 1
        %s337 = smul.addr %s336, 64
        %s338 = scalar_lea.vmem [#allocation3], %s337
        %p339 = pneg %p57
        %p340 = pneg %p54
        %s341 = smul.u32 16, %s22
        %p342 = scmp.lt.s32.totalorder %s341, 79
        %s343 = scalar_select %p342, %s341, 79
        %p344 = scmp.lt.s32.totalorder %s21, 0
        %s345 = scalar_select %p344, %s21, 0
        %s346 = sadd.s32 %s345, %s343
        %s347 = smul.addr %s346, 4
        %s348 = scalar_lea.vmem %s1, %s347
        %p349 = pneg %p85
        %p350 = pneg %p82
        %p351 = scmp.lt.s32.totalorder %s21, 0
        %s352 = scalar_select %p351, %s21, 0
        %s353 = scalar_lea.vmem %s2, %s352
        %p354 = pneg %p111
        %p355 = pneg %p108
        %p356 = scmp.lt.s32.totalorder %s21, 0
        %s357 = scalar_select %p356, %s21, 0
        %s358 = scalar_lea.vmem %s3, %s357
        %p359 = pneg %p137
        %p360 = pneg %p134
        %p361 = pneg %p165
        %p362 = pneg %p162
        %s363 = smul.u32 16, %s20
        %p364 = scmp.lt.s32.totalorder %s363, 15
        %s365 = scalar_select %p364, %s363, 15
        %p366 = scmp.lt.s32.totalorder %s21, 0
        %s367 = scalar_select %p366, %s21, 0
        %s368 = sadd.s32 %s367, %s365
        %s369 = smul.addr %s368, 8
        %s370 = scalar_lea.vmem %s4, %s369
        %s371 = smul.u32 16, %s20
        %s372 = smul.u32 16, %s22
        %p373 = scmp.lt.s32.totalorder %s372, 79
        %s374 = scalar_select %p373, %s372, 79
        %p375 = scmp.lt.s32.totalorder %s21, 0
        %s376 = scalar_select %p375, %s21, 0
        %s377 = sadd.s32 %s376, %s374
        %s378 = smul.addr %s377, 4
        %s379 = scalar_lea.vmem %s1, %s378
        %s380 = smul.u32 16, %s22
        %p381 = scmp.lt.s32.totalorder %s21, 0
        %s382 = scalar_select %p381, %s21, 0
        %s383 = scalar_lea.vmem %s2, %s382
        %p384 = scmp.lt.s32.totalorder %s21, 0
        %s385 = scalar_select %p384, %s21, 0
        %s386 = scalar_lea.vmem %s3, %s385
        %s387 = smul.u32 16, %s20
        %p388 = scmp.lt.s32.totalorder %s387, 15
        %s389 = scalar_select %p388, %s387, 15
        %p390 = scmp.lt.s32.totalorder %s21, 0
        %s391 = scalar_select %p390, %s21, 0
        %s392 = sadd.s32 %s391, %s389
        %s393 = smul.addr %s392, 8
        %s394 = scalar_lea.vmem %s4, %s393
        %s395 = smul.u32 16, %s20
        %p397 = scmp.eq.s32.totalorder %s22, 0
        // Predicated region
        $region78: #{residual_block_forward.3} parent=72 // pred_check
          %p398 = pneg %p397
        $region79: #{residual_block_forward.3} parent=72 // pred_check_branch
          %400 = sbr.rel (%p398) target = $region81
        $region80: #{residual_block_forward.3} parent=72 // pred_region
          %401 = vst [vmem:[#allocation2] sm:$0xff] 0.0
          %402 = vst [vmem:[#allocation2 + $0x8] sm:$0xff] 0.0
          %403 = vst [vmem:[#allocation2 + $0x10] sm:$0xff] 0.0
          %404 = vst [vmem:[#allocation2 + $0x18] sm:$0xff] 0.0
          %405 = vst [vmem:[#allocation2 + $0x20] sm:$0xff] 0.0
          %406 = vst [vmem:[#allocation2 + $0x28] sm:$0xff] 0.0
          %407 = vst [vmem:[#allocation2 + $0x30] sm:$0xff] 0.0
          %408 = vst [vmem:[#allocation2 + $0x38] sm:$0xff] 0.0
          %409 = vst [vmem:[#allocation2 + $0x40] sm:$0xff] 0.0
          %410 = vst [vmem:[#allocation2 + $0x48] sm:$0xff] 0.0
          %411 = vst [vmem:[#allocation2 + $0x50] sm:$0xff] 0.0
          %412 = vst [vmem:[#allocation2 + $0x58] sm:$0xff] 0.0
          %413 = vst [vmem:[#allocation2 + $0x60] sm:$0xff] 0.0
          %414 = vst [vmem:[#allocation2 + $0x68] sm:$0xff] 0.0
          %415 = vst [vmem:[#allocation2 + $0x70] sm:$0xff] 0.0
          %416 = vst [vmem:[#allocation2 + $0x78] sm:$0xff] 0.0
        $region81: #{residual_block_forward.3} parent=72 // pred_fallthru
          _
        %v417 = vld [vmem:[#allocation2] sm:$0xff]
        %v418 = vld [vmem:[#allocation2 + $0x8] sm:$0xff]
        %v419 = vld [vmem:[#allocation2 + $0x10] sm:$0xff]
        %v420 = vld [vmem:[#allocation2 + $0x18] sm:$0xff]
        %v421 = vld [vmem:[#allocation2 + $0x20] sm:$0xff]
        %v422 = vld [vmem:[#allocation2 + $0x28] sm:$0xff]
        %v423 = vld [vmem:[#allocation2 + $0x30] sm:$0xff]
        %v424 = vld [vmem:[#allocation2 + $0x38] sm:$0xff]
        %v425 = vld [vmem:[#allocation2 + $0x40] sm:$0xff]
        %v426 = vld [vmem:[#allocation2 + $0x48] sm:$0xff]
        %v427 = vld [vmem:[#allocation2 + $0x50] sm:$0xff]
        %v428 = vld [vmem:[#allocation2 + $0x58] sm:$0xff]
        %v429 = vld [vmem:[#allocation2 + $0x60] sm:$0xff]
        %v430 = vld [vmem:[#allocation2 + $0x68] sm:$0xff]
        %v431 = vld [vmem:[#allocation2 + $0x70] sm:$0xff]
        %v432 = vld [vmem:[#allocation2 + $0x78] sm:$0xff]
        %v433 = vld [vmem:[%s331] sm:$0xf]
        %v434 = vld [vmem:[%s331 + $0x4] sm:$0xf]
        %v435 = vld [vmem:[%s331 + $0x8] sm:$0xf]
        %v436 = vld [vmem:[%s331 + $0xc] sm:$0xf]
        %v437 = vld [vmem:[%s331 + $0x10] sm:$0xf]
        %v438 = vld [vmem:[%s331 + $0x14] sm:$0xf]
        %v439 = vld [vmem:[%s331 + $0x18] sm:$0xf]
        %v440 = vld [vmem:[%s331 + $0x1c] sm:$0xf]
        %v441 = vld [vmem:[%s331 + $0x20] sm:$0xf]
        %v442 = vld [vmem:[%s331 + $0x24] sm:$0xf]
        %v443 = vld [vmem:[%s331 + $0x28] sm:$0xf]
        %v444 = vld [vmem:[%s331 + $0x2c] sm:$0xf]
        %v445 = vld [vmem:[%s331 + $0x30] sm:$0xf]
        %v446 = vld [vmem:[%s331 + $0x34] sm:$0xf]
        %v447 = vld [vmem:[%s331 + $0x38] sm:$0xf]
        %v448 = vld [vmem:[%s331 + $0x3c] sm:$0xf]
        %v449 = vld [vmem:[%s379] sm:$0xf]
        %v450 = vld [vmem:[%s379 + $0x4] sm:$0xf]
        %v451 = vld [vmem:[%s379 + $0x8] sm:$0xf]
        %v452 = vld [vmem:[%s379 + $0xc] sm:$0xf]
        %v453 = vld [vmem:[%s379 + $0x10] sm:$0xf]
        %v454 = vld [vmem:[%s379 + $0x14] sm:$0xf]
        %v455 = vld [vmem:[%s379 + $0x18] sm:$0xf]
        %v456 = vld [vmem:[%s379 + $0x1c] sm:$0xf]
        %v457 = vld [vmem:[%s379 + $0x20] sm:$0xf]
        %v458 = vld [vmem:[%s379 + $0x24] sm:$0xf]
        %v459 = vld [vmem:[%s379 + $0x28] sm:$0xf]
        %v460 = vld [vmem:[%s379 + $0x2c] sm:$0xf]
        %v461 = vld [vmem:[%s379 + $0x30] sm:$0xf]
        %v462 = vld [vmem:[%s379 + $0x34] sm:$0xf]
        %v463 = vld [vmem:[%s379 + $0x38] sm:$0xf]
        %v464 = vld [vmem:[%s379 + $0x3c] sm:$0xf]
        %v481 = vunpack.c.l.b16 %v433
        %v482 = vunpack.c.l.b16 %v434
        %v483 = vunpack.c.l.b16 %v435
        %v484 = vunpack.c.l.b16 %v436
        %v485 = vunpack.c.l.b16 %v437
        %v486 = vunpack.c.l.b16 %v438
        %v487 = vunpack.c.l.b16 %v439
        %v488 = vunpack.c.l.b16 %v440
        %v489 = vunpack.c.l.b16 %v441
        %v490 = vunpack.c.l.b16 %v442
        %v491 = vunpack.c.l.b16 %v443
        %v492 = vunpack.c.l.b16 %v444
        %v493 = vunpack.c.l.b16 %v445
        %v494 = vunpack.c.l.b16 %v446
        %v495 = vunpack.c.l.b16 %v447
        %v496 = vunpack.c.l.b16 %v448
        %v497 = vpack.c.b16 %v482, %v481
        %v498 = vpack.c.b16 %v484, %v483
        %v499 = vpack.c.b16 %v486, %v485
        %v500 = vpack.c.b16 %v488, %v487
        %v501 = vpack.c.b16 %v490, %v489
        %v502 = vpack.c.b16 %v492, %v491
        %v503 = vpack.c.b16 %v494, %v493
        %v504 = vpack.c.b16 %v496, %v495
        %v529 = vunpack.c.l.b16 %v449
        %v530 = vunpack.c.l.b16 %v450
        %v531 = vunpack.c.l.b16 %v451
        %v532 = vunpack.c.l.b16 %v452
        %v533 = vunpack.c.l.b16 %v453
        %v534 = vunpack.c.l.b16 %v454
        %v535 = vunpack.c.l.b16 %v455
        %v536 = vunpack.c.l.b16 %v456
        %v537 = vunpack.c.l.b16 %v457
        %v538 = vunpack.c.l.b16 %v458
        %v539 = vunpack.c.l.b16 %v459
        %v540 = vunpack.c.l.b16 %v460
        %v541 = vunpack.c.l.b16 %v461
        %v542 = vunpack.c.l.b16 %v462
        %v543 = vunpack.c.l.b16 %v463
        %v544 = vunpack.c.l.b16 %v464
        %v545 = vpack.c.b16 %v530, %v529
        %v546 = vpack.c.b16 %v532, %v531
        %v547 = vpack.c.b16 %v534, %v533
        %v548 = vpack.c.b16 %v536, %v535
        %v549 = vpack.c.b16 %v538, %v537
        %v550 = vpack.c.b16 %v540, %v539
        %v551 = vpack.c.b16 %v542, %v541
        %v552 = vpack.c.b16 %v544, %v543
        %561 = vmatprep.subr.bf16.mxu0 0
        %562 = vmatpush1.bf16.msra.mxu0 %v552
        %563 = vmatprep.subr.bf16.mxu0 0
        %564 = vmatpush1.bf16.msra.mxu0 %v551
        %565 = vmatprep.subr.bf16.mxu0 0
        %566 = vmatpush1.bf16.msra.mxu0 %v550
        %567 = vmatprep.subr.bf16.mxu0 0
        %568 = vmatpush1.bf16.msra.mxu0 %v549
        %569 = vmatprep.subr.bf16.mxu0 0
        %570 = vmatpush1.bf16.msra.mxu0 %v548
        %571 = vmatprep.subr.bf16.mxu0 0
        %572 = vmatpush1.bf16.msra.mxu0 %v547
        %573 = vmatprep.subr.bf16.mxu0 0
        %574 = vmatpush1.bf16.msra.mxu0 %v546
        %575 = vmatprep.subr.bf16.mxu0 0
        %576 = vmatpush1.bf16.msra.mxu0 %v545
        %577 = vmatprep.subr.bf16.mxu0 0
        %578 = vmatpush2.bf16.msra.mxu0 0
        %579 = vmatprep.subr.bf16.mxu0 0
        %580 = vmatpush2.bf16.msra.mxu0 0
        %581 = vmatprep.subr.bf16.mxu0 0
        %582 = vmatpush2.bf16.msra.mxu0 0
        %583 = vmatprep.subr.bf16.mxu0 0
        %584 = vmatpush2.bf16.msra.mxu0 0
        %585 = vmatprep.subr.bf16.mxu0 0
        %586 = vmatpush2.bf16.msra.mxu0 0
        %587 = vmatprep.subr.bf16.mxu0 0
        %588 = vmatpush2.bf16.msra.mxu0 0
        %589 = vmatprep.subr.bf16.mxu0 0
        %590 = vmatpush2.bf16.msra.mxu0 0
        %591 = vmatprep.subr.bf16.mxu0 0
        %592 = vmatpush2.bf16.msra.mxu0 0
        %593 = vmatprep.mubr.bf16.mxu0 0
        %594 = vmatmul.mubr.bf16.gmra.mxu0 %v497
        %v595 = vpop.f32.mrf.mxu0
        %v596 = vadd.f32 0.0, %v595
        %v597 = vpop.f32.mrf.mxu0
        %v598 = vpop.f32.mrf.mxu0
        %v599 = vadd.f32 0.0, %v598
        %v600 = vpop.f32.mrf.mxu0
        %601 = vmatprep.mubr.bf16.mxu0 0
        %602 = vmatmul.mubr.bf16.gmra.mxu0 %v498
        %v603 = vpop.f32.mrf.mxu0
        %v604 = vadd.f32 0.0, %v603
        %v605 = vpop.f32.mrf.mxu0
        %v606 = vpop.f32.mrf.mxu0
        %v607 = vadd.f32 0.0, %v606
        %v608 = vpop.f32.mrf.mxu0
        %609 = vmatprep.mubr.bf16.mxu0 0
        %610 = vmatmul.mubr.bf16.gmra.mxu0 %v499
        %v611 = vpop.f32.mrf.mxu0
        %v612 = vadd.f32 0.0, %v611
        %v613 = vpop.f32.mrf.mxu0
        %v614 = vpop.f32.mrf.mxu0
        %v615 = vadd.f32 0.0, %v614
        %v616 = vpop.f32.mrf.mxu0
        %617 = vmatprep.mubr.bf16.mxu0 0
        %618 = vmatmul.mubr.bf16.gmra.mxu0 %v500
        %v619 = vpop.f32.mrf.mxu0
        %v620 = vadd.f32 0.0, %v619
        %v621 = vpop.f32.mrf.mxu0
        %v622 = vpop.f32.mrf.mxu0
        %v623 = vadd.f32 0.0, %v622
        %v624 = vpop.f32.mrf.mxu0
        %625 = vmatprep.mubr.bf16.mxu0 0
        %626 = vmatmul.mubr.bf16.gmra.mxu0 %v501
        %v627 = vpop.f32.mrf.mxu0
        %v628 = vadd.f32 0.0, %v627
        %v629 = vpop.f32.mrf.mxu0
        %v630 = vpop.f32.mrf.mxu0
        %v631 = vadd.f32 0.0, %v630
        %v632 = vpop.f32.mrf.mxu0
        %633 = vmatprep.mubr.bf16.mxu0 0
        %634 = vmatmul.mubr.bf16.gmra.mxu0 %v502
        %v635 = vpop.f32.mrf.mxu0
        %v636 = vadd.f32 0.0, %v635
        %v637 = vpop.f32.mrf.mxu0
        %v638 = vpop.f32.mrf.mxu0
        %v639 = vadd.f32 0.0, %v638
        %v640 = vpop.f32.mrf.mxu0
        %641 = vmatprep.mubr.bf16.mxu0 0
        %642 = vmatmul.mubr.bf16.gmra.mxu0 %v503
        %v643 = vpop.f32.mrf.mxu0
        %v644 = vadd.f32 0.0, %v643
        %v645 = vpop.f32.mrf.mxu0
        %v646 = vpop.f32.mrf.mxu0
        %v647 = vadd.f32 0.0, %v646
        %v648 = vpop.f32.mrf.mxu0
        %649 = vmatprep.mubr.bf16.mxu0 0
        %650 = vmatmul.mubr.bf16.gmra.mxu0 %v504
        %v651 = vpop.f32.mrf.mxu0
        %v652 = vadd.f32 0.0, %v651
        %v653 = vpop.f32.mrf.mxu0
        %v654 = vpop.f32.mrf.mxu0
        %v655 = vadd.f32 0.0, %v654
        %v656 = vpop.f32.mrf.mxu0
        %657 = vdwg.mxu0
        %v658 = vadd.f32 %v417, %v596
        %v659 = vadd.f32 %v418, %v599
        %v660 = vadd.f32 %v419, %v604
        %v661 = vadd.f32 %v420, %v607
        %v662 = vadd.f32 %v421, %v612
        %v663 = vadd.f32 %v422, %v615
        %v664 = vadd.f32 %v423, %v620
        %v665 = vadd.f32 %v424, %v623
        %v666 = vadd.f32 %v425, %v628
        %v667 = vadd.f32 %v426, %v631
        %v668 = vadd.f32 %v427, %v636
        %v669 = vadd.f32 %v428, %v639
        %v670 = vadd.f32 %v429, %v644
        %v671 = vadd.f32 %v430, %v647
        %v672 = vadd.f32 %v431, %v652
        %v673 = vadd.f32 %v432, %v655
        %674 = vst [vmem:[#allocation2] sm:$0xff] %v658
        %675 = vst [vmem:[#allocation2 + $0x8] sm:$0xff] %v659
        %676 = vst [vmem:[#allocation2 + $0x10] sm:$0xff] %v660
        %677 = vst [vmem:[#allocation2 + $0x18] sm:$0xff] %v661
        %678 = vst [vmem:[#allocation2 + $0x20] sm:$0xff] %v662
        %679 = vst [vmem:[#allocation2 + $0x28] sm:$0xff] %v663
        %680 = vst [vmem:[#allocation2 + $0x30] sm:$0xff] %v664
        %681 = vst [vmem:[#allocation2 + $0x38] sm:$0xff] %v665
        %682 = vst [vmem:[#allocation2 + $0x40] sm:$0xff] %v666
        %683 = vst [vmem:[#allocation2 + $0x48] sm:$0xff] %v667
        %684 = vst [vmem:[#allocation2 + $0x50] sm:$0xff] %v668
        %685 = vst [vmem:[#allocation2 + $0x58] sm:$0xff] %v669
        %686 = vst [vmem:[#allocation2 + $0x60] sm:$0xff] %v670
        %687 = vst [vmem:[#allocation2 + $0x68] sm:$0xff] %v671
        %688 = vst [vmem:[#allocation2 + $0x70] sm:$0xff] %v672
        %689 = vst [vmem:[#allocation2 + $0x78] sm:$0xff] %v673
        %p690 = scmp.eq.s32.totalorder %s22, 4
        // Predicated region
        $region82: #{residual_block_forward.3} parent=72 // pred_check
          %p691 = pneg %p690
        $region83: #{residual_block_forward.3} parent=72 // pred_check_branch
          %693 = sbr.rel (%p691) target = $region85
        $region84: #{residual_block_forward.3} parent=72 // pred_region
          %v694 = vld [vmem:[#allocation2] sm:$0xff]
          %v695 = vld [vmem:[#allocation2 + $0x8] sm:$0xff]
          %v696 = vld [vmem:[#allocation2 + $0x10] sm:$0xff]
          %v697 = vld [vmem:[#allocation2 + $0x18] sm:$0xff]
          %v698 = vld [vmem:[#allocation2 + $0x20] sm:$0xff]
          %v699 = vld [vmem:[#allocation2 + $0x28] sm:$0xff]
          %v700 = vld [vmem:[#allocation2 + $0x30] sm:$0xff]
          %v701 = vld [vmem:[#allocation2 + $0x38] sm:$0xff]
          %v702 = vld [vmem:[#allocation2 + $0x40] sm:$0xff]
          %v703 = vld [vmem:[#allocation2 + $0x48] sm:$0xff]
          %v704 = vld [vmem:[#allocation2 + $0x50] sm:$0xff]
          %v705 = vld [vmem:[#allocation2 + $0x58] sm:$0xff]
          %v706 = vld [vmem:[#allocation2 + $0x60] sm:$0xff]
          %v707 = vld [vmem:[#allocation2 + $0x68] sm:$0xff]
          %v708 = vld [vmem:[#allocation2 + $0x70] sm:$0xff]
          %v709 = vld [vmem:[#allocation2 + $0x78] sm:$0xff]
          %v710 = vld [vmem:[%s383] sm:$0x1]
          %v712 = vlaneseq
          %v713 = vshrl.u32 %v712, 7
          %v714 = vsub.s32 0, %v713
          %v715 = vrot.slane %v710, %v714
          %v717 = vmul.f32 %v694, %v715
          %v718 = vmul.f32 %v695, %v715
          %v719 = vmul.f32 %v696, %v715
          %v720 = vmul.f32 %v697, %v715
          %v721 = vmul.f32 %v698, %v715
          %v722 = vmul.f32 %v699, %v715
          %v723 = vmul.f32 %v700, %v715
          %v724 = vmul.f32 %v701, %v715
          %v725 = vmul.f32 %v702, %v715
          %v726 = vmul.f32 %v703, %v715
          %v727 = vmul.f32 %v704, %v715
          %v728 = vmul.f32 %v705, %v715
          %v729 = vmul.f32 %v706, %v715
          %v730 = vmul.f32 %v707, %v715
          %v731 = vmul.f32 %v708, %v715
          %v732 = vmul.f32 %v709, %v715
          %v733 = vld [vmem:[%s386] sm:$0x1]
          %v735 = vlaneseq
          %v736 = vshrl.u32 %v735, 7
          %v737 = vsub.s32 0, %v736
          %v738 = vrot.slane %v733, %v737
          %v740 = vadd.f32 %v717, %v738
          %v741 = vadd.f32 %v718, %v738
          %v742 = vadd.f32 %v719, %v738
          %v743 = vadd.f32 %v720, %v738
          %v744 = vadd.f32 %v721, %v738
          %v745 = vadd.f32 %v722, %v738
          %v746 = vadd.f32 %v723, %v738
          %v747 = vadd.f32 %v724, %v738
          %v748 = vadd.f32 %v725, %v738
          %v749 = vadd.f32 %v726, %v738
          %v750 = vadd.f32 %v727, %v738
          %v751 = vadd.f32 %v728, %v738
          %v752 = vadd.f32 %v729, %v738
          %v753 = vadd.f32 %v730, %v738
          %v754 = vadd.f32 %v731, %v738
          %v755 = vadd.f32 %v732, %v738
          %v756 = vmax.f32 %v740, 0.0
          %v757 = vmax.f32 %v741, 0.0
          %v758 = vmax.f32 %v742, 0.0
          %v759 = vmax.f32 %v743, 0.0
          %v760 = vmax.f32 %v744, 0.0
          %v761 = vmax.f32 %v745, 0.0
          %v762 = vmax.f32 %v746, 0.0
          %v763 = vmax.f32 %v747, 0.0
          %v764 = vmax.f32 %v748, 0.0
          %v765 = vmax.f32 %v749, 0.0
          %v766 = vmax.f32 %v750, 0.0
          %v767 = vmax.f32 %v751, 0.0
          %v768 = vmax.f32 %v752, 0.0
          %v769 = vmax.f32 %v753, 0.0
          %v770 = vmax.f32 %v754, 0.0
          %v771 = vmax.f32 %v755, 0.0
          %772 = vst [vmem:[%s394] sm:$0xff] %v756
          %773 = vst [vmem:[%s394 + $0x8] sm:$0xff] %v757
          %774 = vst [vmem:[%s394 + $0x10] sm:$0xff] %v758
          %775 = vst [vmem:[%s394 + $0x18] sm:$0xff] %v759
          %776 = vst [vmem:[%s394 + $0x20] sm:$0xff] %v760
          %777 = vst [vmem:[%s394 + $0x28] sm:$0xff] %v761
          %778 = vst [vmem:[%s394 + $0x30] sm:$0xff] %v762
          %779 = vst [vmem:[%s394 + $0x38] sm:$0xff] %v763
          %780 = vst [vmem:[%s394 + $0x40] sm:$0xff] %v764
          %781 = vst [vmem:[%s394 + $0x48] sm:$0xff] %v765
          %782 = vst [vmem:[%s394 + $0x50] sm:$0xff] %v766
          %783 = vst [vmem:[%s394 + $0x58] sm:$0xff] %v767
          %784 = vst [vmem:[%s394 + $0x60] sm:$0xff] %v768
          %785 = vst [vmem:[%s394 + $0x68] sm:$0xff] %v769
          %786 = vst [vmem:[%s394 + $0x70] sm:$0xff] %v770
          %787 = vst [vmem:[%s394 + $0x78] sm:$0xff] %v771
        $region85: #{residual_block_forward.3} parent=72 // pred_fallthru
          _
        %s788 = smul.u32 16, %s20
        %p789 = scmp.lt.s32.totalorder %s788, 15
        %s790 = scalar_select %p789, %s788, 15
        %p791 = scmp.lt.s32.totalorder %s21, 0
        %s792 = scalar_select %p791, %s21, 0
        %s793 = sadd.s32 %s792, %s790
        %s794 = smul.addr %s793, 8
        %s795 = scalar_lea.vmem %s4, %s794
        // Predicated region
        $region86: #{residual_block_forward.3} parent=72 // pred_check
          %p796 = pneg %p162
        $region87: #{residual_block_forward.3} parent=72 // pred_check_branch
          %798 = sbr.rel (%p796) target = $region89
        $region88: #{residual_block_forward.3} parent=72 // pred_region
          %s799 = smul.u32 16, %s20
        $region89: #{residual_block_forward.3} parent=72 // pred_fallthru
          _
        // Predicated region
        $region90: #{residual_block_forward.3} parent=72 // pred_check
          %p800 = pneg %p162
        $region91: #{residual_block_forward.3} parent=72 // pred_check_branch
          %802 = sbr.rel (%p800) target = $region93
        $region92: #{residual_block_forward.3} parent=72 // pred_region
          %s803 = smul.u32 16, %s20
          %p804 = scmp.lt.s32.totalorder %s803, 15
          %s805 = scalar_select %p804, %s803, 15
          %p806 = scmp.lt.s32.totalorder %s21, 0
          %s807 = scalar_select %p806, %s21, 0
          %s808 = sadd.s32 %s807, %s805
          %s809 = smul.addr %s808, 8
          %s810 = scalar_lea.vmem %s4, %s809
        $region93: #{residual_block_forward.3} parent=72 // pred_fallthru
          _
      $region73: #{residual_block_forward.3} parent=5 // pred_fallthru
        _
      %p811 = scmp.le.s32.totalorder 2, %s10
      // Predicated region
      $region94: #{residual_block_forward.3} parent=5 // pred_check
        %p812 = pneg %p811
      $region95: #{residual_block_forward.3} parent=5 // pred_check_branch
        %814 = sbr.rel (%p812) target = $region97
      $region96: #{residual_block_forward.3} parent=5 // pred_region
        %s815 = ssub.s32 %s10, 2
      $region97: #{residual_block_forward.3} parent=5 // pred_fallthru
        _
    $region6: #{residual_block_forward.3} parent=1 // loop_footer
      %s14 = sadd.s32 1, %s10
    $region7: #{residual_block_forward.3} parent=1 // loop_footer_branch
      %9 = sbr.rel target = $region3
    $region8: #{residual_block_forward.3} parent=1 // loop_exit
      _

// kernel: residual_block_forward.4
$region0: #{residual_block_forward.4}
  #allocation0 [shape = 'u32[]', space=smem, size = 0x4, offset = 0x4, fixed_abs, tag = 'smem constant byte address 0x4 - core index']
  #allocation1 [shape = 'u32[144,128]{1,0:T(1,128)}', space=vmem, size = 0x12000, scoped, tag = 'internal scratch']
  #allocation2 [shape = 'f32[128,128]{1,0:T(8,128)}', space=vmem, size = 0x10000, scoped, tag = 'scratch operand']
  %s0 = inlined_call_operand.vmem [shape: bf16[128,128], index: 0, kind: input, shape index: {}]
  %s1 = inlined_call_operand.vmem [shape: bf16[128,128], index: 1, kind: input, shape index: {}]
  %s2 = inlined_call_operand.vmem [shape: f32[1,128], index: 2, kind: input, shape index: {}]
  %s3 = inlined_call_operand.vmem [shape: f32[1,128], index: 3, kind: input, shape index: {}]
  %s4 = inlined_call_operand.vmem [shape: f32[128,128], index: 4, kind: output, shape index: {}]
  %s5 = sld [smem:[#allocation0]]
  $region34: #{residual_block_forward.4} parent=0
    _
  %s7 = ssub.s32 1, %s5
  %s8 = scalar_select 0, %s7, %s5
  // Predicated region
  $region2: #{residual_block_forward.4} parent=0 // pred_check
    _
  $region3: #{residual_block_forward.4} parent=0 // pred_check_branch
    %10 = sbr.rel (0) target = $region5
  $region4: #{residual_block_forward.4} parent=0 // pred_region
    _
  $region5: #{residual_block_forward.4} parent=0 // pred_fallthru
    _
  // Predicated region
  $region6: #{residual_block_forward.4} parent=0 // pred_check
    _
  $region7: #{residual_block_forward.4} parent=0 // pred_check_branch
    %12 = sbr.rel (0) target = $region9
  $region8: #{residual_block_forward.4} parent=0 // pred_region
    _
  $region9: #{residual_block_forward.4} parent=0 // pred_fallthru
    _
  // Predicated region
  $region10: #{residual_block_forward.4} parent=0 // pred_check
    _
  $region11: #{residual_block_forward.4} parent=0 // pred_check_branch
    %14 = sbr.rel (0) target = $region13
  $region12: #{residual_block_forward.4} parent=0 // pred_region
    _
  $region13: #{residual_block_forward.4} parent=0 // pred_fallthru
    _
  // Predicated region
  $region14: #{residual_block_forward.4} parent=0 // pred_check
    _
  $region15: #{residual_block_forward.4} parent=0 // pred_check_branch
    %16 = sbr.rel (0) target = $region17
  $region16: #{residual_block_forward.4} parent=0 // pred_region
    _
  $region17: #{residual_block_forward.4} parent=0 // pred_fallthru
    _
  %p18 = scmp.eq.s32.totalorder 0, 0
  // Predicated region
  $region18: #{residual_block_forward.4} parent=0 // pred_check
    %p19 = pneg %p18
  $region19: #{residual_block_forward.4} parent=0 // pred_check_branch
    %21 = sbr.rel (%p19) target = $region21
  $region20: #{residual_block_forward.4} parent=0 // pred_region
    %22 = vst [vmem:[#allocation2] sm:$0xff] 0.0
    %23 = vst [vmem:[#allocation2 + $0x8] sm:$0xff] 0.0
    %24 = vst [vmem:[#allocation2 + $0x10] sm:$0xff] 0.0
    %25 = vst [vmem:[#allocation2 + $0x18] sm:$0xff] 0.0
    %26 = vst [vmem:[#allocation2 + $0x20] sm:$0xff] 0.0
    %27 = vst [vmem:[#allocation2 + $0x28] sm:$0xff] 0.0
    %28 = vst [vmem:[#allocation2 + $0x30] sm:$0xff] 0.0
    %29 = vst [vmem:[#allocation2 + $0x38] sm:$0xff] 0.0
    %30 = vst [vmem:[#allocation2 + $0x40] sm:$0xff] 0.0
    %31 = vst [vmem:[#allocation2 + $0x48] sm:$0xff] 0.0
    %32 = vst [vmem:[#allocation2 + $0x50] sm:$0xff] 0.0
    %33 = vst [vmem:[#allocation2 + $0x58] sm:$0xff] 0.0
    %34 = vst [vmem:[#allocation2 + $0x60] sm:$0xff] 0.0
    %35 = vst [vmem:[#allocation2 + $0x68] sm:$0xff] 0.0
    %36 = vst [vmem:[#allocation2 + $0x70] sm:$0xff] 0.0
    %37 = vst [vmem:[#allocation2 + $0x78] sm:$0xff] 0.0
  $region21: #{residual_block_forward.4} parent=0 // pred_fallthru
    _
  %v38 = vld [vmem:[#allocation2] sm:$0xff]
  %v39 = vld [vmem:[#allocation2 + $0x8] sm:$0xff]
  %v40 = vld [vmem:[#allocation2 + $0x10] sm:$0xff]
  %v41 = vld [vmem:[#allocation2 + $0x18] sm:$0xff]
  %v42 = vld [vmem:[#allocation2 + $0x20] sm:$0xff]
  %v43 = vld [vmem:[#allocation2 + $0x28] sm:$0xff]
  %v44 = vld [vmem:[#allocation2 + $0x30] sm:$0xff]
  %v45 = vld [vmem:[#allocation2 + $0x38] sm:$0xff]
  %v46 = vld [vmem:[#allocation2 + $0x40] sm:$0xff]
  %v47 = vld [vmem:[#allocation2 + $0x48] sm:$0xff]
  %v48 = vld [vmem:[#allocation2 + $0x50] sm:$0xff]
  %v49 = vld [vmem:[#allocation2 + $0x58] sm:$0xff]
  %v50 = vld [vmem:[#allocation2 + $0x60] sm:$0xff]
  %v51 = vld [vmem:[#allocation2 + $0x68] sm:$0xff]
  %v52 = vld [vmem:[#allocation2 + $0x70] sm:$0xff]
  %v53 = vld [vmem:[#allocation2 + $0x78] sm:$0xff]
  %v54 = vld [vmem:[%s0] sm:$0xf]
  %v55 = vld [vmem:[%s0 + $0x4] sm:$0xf]
  %v56 = vld [vmem:[%s0 + $0x8] sm:$0xf]
  %v57 = vld [vmem:[%s0 + $0xc] sm:$0xf]
  %v58 = vld [vmem:[%s0 + $0x10] sm:$0xf]
  %v59 = vld [vmem:[%s0 + $0x14] sm:$0xf]
  %v60 = vld [vmem:[%s0 + $0x18] sm:$0xf]
  %v61 = vld [vmem:[%s0 + $0x1c] sm:$0xf]
  %v62 = vld [vmem:[%s0 + $0x20] sm:$0xf]
  %v63 = vld [vmem:[%s0 + $0x24] sm:$0xf]
  %v64 = vld [vmem:[%s0 + $0x28] sm:$0xf]
  %v65 = vld [vmem:[%s0 + $0x2c] sm:$0xf]
  %v66 = vld [vmem:[%s0 + $0x30] sm:$0xf]
  %v67 = vld [vmem:[%s0 + $0x34] sm:$0xf]
  %v68 = vld [vmem:[%s0 + $0x38] sm:$0xf]
  %v69 = vld [vmem:[%s0 + $0x3c] sm:$0xf]
  %v70 = vld [vmem:[%s1] sm:$0xf]
  %v71 = vld [vmem:[%s1 + $0x4] sm:$0xf]
  %v72 = vld [vmem:[%s1 + $0x8] sm:$0xf]
  %v73 = vld [vmem:[%s1 + $0xc] sm:$0xf]
  %v74 = vld [vmem:[%s1 + $0x10] sm:$0xf]
  %v75 = vld [vmem:[%s1 + $0x14] sm:$0xf]
  %v76 = vld [vmem:[%s1 + $0x18] sm:$0xf]
  %v77 = vld [vmem:[%s1 + $0x1c] sm:$0xf]
  %v78 = vld [vmem:[%s1 + $0x20] sm:$0xf]
  %v79 = vld [vmem:[%s1 + $0x24] sm:$0xf]
  %v80 = vld [vmem:[%s1 + $0x28] sm:$0xf]
  %v81 = vld [vmem:[%s1 + $0x2c] sm:$0xf]
  %v82 = vld [vmem:[%s1 + $0x30] sm:$0xf]
  %v83 = vld [vmem:[%s1 + $0x34] sm:$0xf]
  %v84 = vld [vmem:[%s1 + $0x38] sm:$0xf]
  %v85 = vld [vmem:[%s1 + $0x3c] sm:$0xf]
  %v102 = vunpack.c.l.b16 %v54
  %v103 = vunpack.c.l.b16 %v55
  %v104 = vunpack.c.l.b16 %v56
  %v105 = vunpack.c.l.b16 %v57
  %v106 = vunpack.c.l.b16 %v58
  %v107 = vunpack.c.l.b16 %v59
  %v108 = vunpack.c.l.b16 %v60
  %v109 = vunpack.c.l.b16 %v61
  %v110 = vunpack.c.l.b16 %v62
  %v111 = vunpack.c.l.b16 %v63
  %v112 = vunpack.c.l.b16 %v64
  %v113 = vunpack.c.l.b16 %v65
  %v114 = vunpack.c.l.b16 %v66
  %v115 = vunpack.c.l.b16 %v67
  %v116 = vunpack.c.l.b16 %v68
  %v117 = vunpack.c.l.b16 %v69
  %v118 = vpack.c.b16 %v103, %v102
  %v119 = vpack.c.b16 %v105, %v104
  %v120 = vpack.c.b16 %v107, %v106
  %v121 = vpack.c.b16 %v109, %v108
  %v122 = vpack.c.b16 %v111, %v110
  %v123 = vpack.c.b16 %v113, %v112
  %v124 = vpack.c.b16 %v115, %v114
  %v125 = vpack.c.b16 %v117, %v116
  %v150 = vunpack.c.l.b16 %v70
  %v151 = vunpack.c.l.b16 %v71
  %v152 = vunpack.c.l.b16 %v72
  %v153 = vunpack.c.l.b16 %v73
  %v154 = vunpack.c.l.b16 %v74
  %v155 = vunpack.c.l.b16 %v75
  %v156 = vunpack.c.l.b16 %v76
  %v157 = vunpack.c.l.b16 %v77
  %v158 = vunpack.c.l.b16 %v78
  %v159 = vunpack.c.l.b16 %v79
  %v160 = vunpack.c.l.b16 %v80
  %v161 = vunpack.c.l.b16 %v81
  %v162 = vunpack.c.l.b16 %v82
  %v163 = vunpack.c.l.b16 %v83
  %v164 = vunpack.c.l.b16 %v84
  %v165 = vunpack.c.l.b16 %v85
  %v166 = vpack.c.b16 %v151, %v150
  %v167 = vpack.c.b16 %v153, %v152
  %v168 = vpack.c.b16 %v155, %v154
  %v169 = vpack.c.b16 %v157, %v156
  %v170 = vpack.c.b16 %v159, %v158
  %v171 = vpack.c.b16 %v161, %v160
  %v172 = vpack.c.b16 %v163, %v162
  %v173 = vpack.c.b16 %v165, %v164
  %182 = vmatprep.subr.bf16.mxu0 0
  %183 = vmatpush1.bf16.msra.mxu0 %v173
  %184 = vmatprep.subr.bf16.mxu0 0
  %185 = vmatpush1.bf16.msra.mxu0 %v172
  %186 = vmatprep.subr.bf16.mxu0 0
  %187 = vmatpush1.bf16.msra.mxu0 %v171
  %188 = vmatprep.subr.bf16.mxu0 0
  %189 = vmatpush1.bf16.msra.mxu0 %v170
  %190 = vmatprep.subr.bf16.mxu0 0
  %191 = vmatpush1.bf16.msra.mxu0 %v169
  %192 = vmatprep.subr.bf16.mxu0 0
  %193 = vmatpush1.bf16.msra.mxu0 %v168
  %194 = vmatprep.subr.bf16.mxu0 0
  %195 = vmatpush1.bf16.msra.mxu0 %v167
  %196 = vmatprep.subr.bf16.mxu0 0
  %197 = vmatpush1.bf16.msra.mxu0 %v166
  %198 = vmatprep.subr.bf16.mxu0 0
  %199 = vmatpush2.bf16.msra.mxu0 0
  %200 = vmatprep.subr.bf16.mxu0 0
  %201 = vmatpush2.bf16.msra.mxu0 0
  %202 = vmatprep.subr.bf16.mxu0 0
  %203 = vmatpush2.bf16.msra.mxu0 0
  %204 = vmatprep.subr.bf16.mxu0 0
  %205 = vmatpush2.bf16.msra.mxu0 0
  %206 = vmatprep.subr.bf16.mxu0 0
  %207 = vmatpush2.bf16.msra.mxu0 0
  %208 = vmatprep.subr.bf16.mxu0 0
  %209 = vmatpush2.bf16.msra.mxu0 0
  %210 = vmatprep.subr.bf16.mxu0 0
  %211 = vmatpush2.bf16.msra.mxu0 0
  %212 = vmatprep.subr.bf16.mxu0 0
  %213 = vmatpush2.bf16.msra.mxu0 0
  %214 = vmatprep.mubr.bf16.mxu0 0
  %215 = vmatmul.mubr.bf16.gmra.mxu0 %v118
  %v216 = vpop.f32.mrf.mxu0
  %v217 = vadd.f32 0.0, %v216
  %v218 = vpop.f32.mrf.mxu0
  %v219 = vpop.f32.mrf.mxu0
  %v220 = vadd.f32 0.0, %v219
  %v221 = vpop.f32.mrf.mxu0
  %222 = vmatprep.mubr.bf16.mxu0 0
  %223 = vmatmul.mubr.bf16.gmra.mxu0 %v119
  %v224 = vpop.f32.mrf.mxu0
  %v225 = vadd.f32 0.0, %v224
  %v226 = vpop.f32.mrf.mxu0
  %v227 = vpop.f32.mrf.mxu0
  %v228 = vadd.f32 0.0, %v227
  %v229 = vpop.f32.mrf.mxu0
  %230 = vmatprep.mubr.bf16.mxu0 0
  %231 = vmatmul.mubr.bf16.gmra.mxu0 %v120
  %v232 = vpop.f32.mrf.mxu0
  %v233 = vadd.f32 0.0, %v232
  %v234 = vpop.f32.mrf.mxu0
  %v235 = vpop.f32.mrf.mxu0
  %v236 = vadd.f32 0.0, %v235
  %v237 = vpop.f32.mrf.mxu0
  %238 = vmatprep.mubr.bf16.mxu0 0
  %239 = vmatmul.mubr.bf16.gmra.mxu0 %v121
  %v240 = vpop.f32.mrf.mxu0
  %v241 = vadd.f32 0.0, %v240
  %v242 = vpop.f32.mrf.mxu0
  %v243 = vpop.f32.mrf.mxu0
  %v244 = vadd.f32 0.0, %v243
  %v245 = vpop.f32.mrf.mxu0
  %246 = vmatprep.mubr.bf16.mxu0 0
  %247 = vmatmul.mubr.bf16.gmra.mxu0 %v122
  %v248 = vpop.f32.mrf.mxu0
  %v249 = vadd.f32 0.0, %v248
  %v250 = vpop.f32.mrf.mxu0
  %v251 = vpop.f32.mrf.mxu0
  %v252 = vadd.f32 0.0, %v251
  %v253 = vpop.f32.mrf.mxu0
  %254 = vmatprep.mubr.bf16.mxu0 0
  %255 = vmatmul.mubr.bf16.gmra.mxu0 %v123
  %v256 = vpop.f32.mrf.mxu0
  %v257 = vadd.f32 0.0, %v256
  %v258 = vpop.f32.mrf.mxu0
  %v259 = vpop.f32.mrf.mxu0
  %v260 = vadd.f32 0.0, %v259
  %v261 = vpop.f32.mrf.mxu0
  %262 = vmatprep.mubr.bf16.mxu0 0
  %263 = vmatmul.mubr.bf16.gmra.mxu0 %v124
  %v264 = vpop.f32.mrf.mxu0
  %v265 = vadd.f32 0.0, %v264
  %v266 = vpop.f32.mrf.mxu0
  %v267 = vpop.f32.mrf.mxu0
  %v268 = vadd.f32 0.0, %v267
  %v269 = vpop.f32.mrf.mxu0
  %270 = vmatprep.mubr.bf16.mxu0 0
  %271 = vmatmul.mubr.bf16.gmra.mxu0 %v125
  %v272 = vpop.f32.mrf.mxu0
  %v273 = vadd.f32 0.0, %v272
  %v274 = vpop.f32.mrf.mxu0
  %v275 = vpop.f32.mrf.mxu0
  %v276 = vadd.f32 0.0, %v275
  %v277 = vpop.f32.mrf.mxu0
  %278 = vdwg.mxu0
  %v279 = vadd.f32 %v38, %v217
  %v280 = vadd.f32 %v39, %v220
  %v281 = vadd.f32 %v40, %v225
  %v282 = vadd.f32 %v41, %v228
  %v283 = vadd.f32 %v42, %v233
  %v284 = vadd.f32 %v43, %v236
  %v285 = vadd.f32 %v44, %v241
  %v286 = vadd.f32 %v45, %v244
  %v287 = vadd.f32 %v46, %v249
  %v288 = vadd.f32 %v47, %v252
  %v289 = vadd.f32 %v48, %v257
  %v290 = vadd.f32 %v49, %v260
  %v291 = vadd.f32 %v50, %v265
  %v292 = vadd.f32 %v51, %v268
  %v293 = vadd.f32 %v52, %v273
  %v294 = vadd.f32 %v53, %v276
  %295 = vst [vmem:[#allocation2] sm:$0xff] %v279
  %296 = vst [vmem:[#allocation2 + $0x8] sm:$0xff] %v280
  %297 = vst [vmem:[#allocation2 + $0x10] sm:$0xff] %v281
  %298 = vst [vmem:[#allocation2 + $0x18] sm:$0xff] %v282
  %299 = vst [vmem:[#allocation2 + $0x20] sm:$0xff] %v283
  %300 = vst [vmem:[#allocation2 + $0x28] sm:$0xff] %v284
  %301 = vst [vmem:[#allocation2 + $0x30] sm:$0xff] %v285
  %302 = vst [vmem:[#allocation2 + $0x38] sm:$0xff] %v286
  %303 = vst [vmem:[#allocation2 + $0x40] sm:$0xff] %v287
  %304 = vst [vmem:[#allocation2 + $0x48] sm:$0xff] %v288
  %305 = vst [vmem:[#allocation2 + $0x50] sm:$0xff] %v289
  %306 = vst [vmem:[#allocation2 + $0x58] sm:$0xff] %v290
  %307 = vst [vmem:[#allocation2 + $0x60] sm:$0xff] %v291
  %308 = vst [vmem:[#allocation2 + $0x68] sm:$0xff] %v292
  %309 = vst [vmem:[#allocation2 + $0x70] sm:$0xff] %v293
  %310 = vst [vmem:[#allocation2 + $0x78] sm:$0xff] %v294
  // Predicated region
  $region22: #{residual_block_forward.4} parent=0 // pred_check
    %p311 = pneg %p18
  $region23: #{residual_block_forward.4} parent=0 // pred_check_branch
    %313 = sbr.rel (%p311) target = $region25
  $region24: #{residual_block_forward.4} parent=0 // pred_region
    %v314 = vld [vmem:[#allocation2] sm:$0xff]
    %v315 = vld [vmem:[#allocation2 + $0x8] sm:$0xff]
    %v316 = vld [vmem:[#allocation2 + $0x10] sm:$0xff]
    %v317 = vld [vmem:[#allocation2 + $0x18] sm:$0xff]
    %v318 = vld [vmem:[#allocation2 + $0x20] sm:$0xff]
    %v319 = vld [vmem:[#allocation2 + $0x28] sm:$0xff]
    %v320 = vld [vmem:[#allocation2 + $0x30] sm:$0xff]
    %v321 = vld [vmem:[#allocation2 + $0x38] sm:$0xff]
    %v322 = vld [vmem:[#allocation2 + $0x40] sm:$0xff]
    %v323 = vld [vmem:[#allocation2 + $0x48] sm:$0xff]
    %v324 = vld [vmem:[#allocation2 + $0x50] sm:$0xff]
    %v325 = vld [vmem:[#allocation2 + $0x58] sm:$0xff]
    %v326 = vld [vmem:[#allocation2 + $0x60] sm:$0xff]
    %v327 = vld [vmem:[#allocation2 + $0x68] sm:$0xff]
    %v328 = vld [vmem:[#allocation2 + $0x70] sm:$0xff]
    %v329 = vld [vmem:[#allocation2 + $0x78] sm:$0xff]
    %v330 = vld [vmem:[%s2] sm:$0x1]
    %v332 = vlaneseq
    %v333 = vshrl.u32 %v332, 7
    %v334 = vsub.s32 0, %v333
    %v335 = vrot.slane %v330, %v334
    %v337 = vmul.f32 %v314, %v335
    %v338 = vmul.f32 %v315, %v335
    %v339 = vmul.f32 %v316, %v335
    %v340 = vmul.f32 %v317, %v335
    %v341 = vmul.f32 %v318, %v335
    %v342 = vmul.f32 %v319, %v335
    %v343 = vmul.f32 %v320, %v335
    %v344 = vmul.f32 %v321, %v335
    %v345 = vmul.f32 %v322, %v335
    %v346 = vmul.f32 %v323, %v335
    %v347 = vmul.f32 %v324, %v335
    %v348 = vmul.f32 %v325, %v335
    %v349 = vmul.f32 %v326, %v335
    %v350 = vmul.f32 %v327, %v335
    %v351 = vmul.f32 %v328, %v335
    %v352 = vmul.f32 %v329, %v335
    %v353 = vld [vmem:[%s3] sm:$0x1]
    %v355 = vlaneseq
    %v356 = vshrl.u32 %v355, 7
    %v357 = vsub.s32 0, %v356
    %v358 = vrot.slane %v353, %v357
    %v360 = vadd.f32 %v337, %v358
    %v361 = vadd.f32 %v338, %v358
    %v362 = vadd.f32 %v339, %v358
    %v363 = vadd.f32 %v340, %v358
    %v364 = vadd.f32 %v341, %v358
    %v365 = vadd.f32 %v342, %v358
    %v366 = vadd.f32 %v343, %v358
    %v367 = vadd.f32 %v344, %v358
    %v368 = vadd.f32 %v345, %v358
    %v369 = vadd.f32 %v346, %v358
    %v370 = vadd.f32 %v347, %v358
    %v371 = vadd.f32 %v348, %v358
    %v372 = vadd.f32 %v349, %v358
    %v373 = vadd.f32 %v350, %v358
    %v374 = vadd.f32 %v351, %v358
    %v375 = vadd.f32 %v352, %v358
    %376 = vst [vmem:[%s4] sm:$0xff] %v360
    %377 = vst [vmem:[%s4 + $0x8] sm:$0xff] %v361
    %378 = vst [vmem:[%s4 + $0x10] sm:$0xff] %v362
    %379 = vst [vmem:[%s4 + $0x18] sm:$0xff] %v363
    %380 = vst [vmem:[%s4 + $0x20] sm:$0xff] %v364
    %381 = vst [vmem:[%s4 + $0x28] sm:$0xff] %v365
    %382 = vst [vmem:[%s4 + $0x30] sm:$0xff] %v366
    %383 = vst [vmem:[%s4 + $0x38] sm:$0xff] %v367
    %384 = vst [vmem:[%s4 + $0x40] sm:$0xff] %v368
    %385 = vst [vmem:[%s4 + $0x48] sm:$0xff] %v369
    %386 = vst [vmem:[%s4 + $0x50] sm:$0xff] %v370
    %387 = vst [vmem:[%s4 + $0x58] sm:$0xff] %v371
    %388 = vst [vmem:[%s4 + $0x60] sm:$0xff] %v372
    %389 = vst [vmem:[%s4 + $0x68] sm:$0xff] %v373
    %390 = vst [vmem:[%s4 + $0x70] sm:$0xff] %v374
    %391 = vst [vmem:[%s4 + $0x78] sm:$0xff] %v375
  $region25: #{residual_block_forward.4} parent=0 // pred_fallthru
    _
  // Predicated region
  $region26: #{residual_block_forward.4} parent=0 // pred_check
    _
  $region27: #{residual_block_forward.4} parent=0 // pred_check_branch
    %393 = sbr.rel (0) target = $region29
  $region28: #{residual_block_forward.4} parent=0 // pred_region
    _
  $region29: #{residual_block_forward.4} parent=0 // pred_fallthru
    _
  // Predicated region
  $region30: #{residual_block_forward.4} parent=0 // pred_check
    _
  $region31: #{residual_block_forward.4} parent=0 // pred_check_branch
    %395 = sbr.rel (0) target = $region33
  $region32: #{residual_block_forward.4} parent=0 // pred_region
    _
  $region33: #{residual_block_forward.4} parent=0 // pred_fallthru
    _

// kernel: residual_block_forward.5
$region0: #{residual_block_forward.5}
  #allocation0 [shape = 'u32[]', space=smem, size = 0x4, offset = 0x4, fixed_abs, tag = 'smem constant byte address 0x4 - core index']
  #allocation1 [shape = 'u32[144,128]{1,0:T(1,128)}', space=vmem, size = 0x12000, scoped, tag = 'internal scratch']
  #allocation2 [shape = 'f32[128,128]{1,0:T(8,128)}', space=vmem, size = 0x10000, scoped, tag = 'scratch operand']
  %s0 = inlined_call_operand.vmem [shape: bf16[128,1152], index: 0, kind: input, shape index: {}]
  %s1 = inlined_call_operand.vmem [shape: bf16[1152,128], index: 1, kind: input, shape index: {}]
  %s2 = inlined_call_operand.vmem [shape: f32[1,128], index: 2, kind: input, shape index: {}]
  %s3 = inlined_call_operand.vmem [shape: f32[1,128], index: 3, kind: input, shape index: {}]
  %s4 = inlined_call_operand.vmem [shape: bf16[128,128], index: 4, kind: input, shape index: {}]
  %s5 = inlined_call_operand.hbm [shape: f32[128,128], index: 5, kind: output, shape index: {}]
  %s6 = sld [smem:[#allocation0]]
  $region87: #{residual_block_forward.5} parent=0
    _
  %s8 = ssub.s32 1, %s6
  %s9 = scalar_select 0, %s8, %s6
  $region1: #{residual_block_forward.5} parent=0
    #allocation3 [shape = 'u8[196608]{0}', space=vmem, size = 0x30000, scoped, tag = 'input window, operand 0']
    #allocation4 [shape = 'u8[65536]{0}', space=vmem, size = 0x10000, scoped, tag = 'output window, operand 0, single buffered']
    #allocation5 [shape = 's32[2]{0}', space=sflag, size = 0x8, scoped, tag = 'scoped memory for residual_block_forward.5']
    %10 = vsyncpa [#allocation5], 0
    loop: start=0, step=1, limit=5
    $region2: #{residual_block_forward.5} parent=1 // loop_pre_header
      _
    $region3: #{residual_block_forward.5} parent=1 // loop_header
      %s12 = sphi 0, %s16
      %p13 = scmp.ge.s32.totalorder %s12, 5
      %s19 = sphi 0, %s38
      %s20 = sphi 0, %s34
      %s21 = sphi 0, %s30
      %s22 = sphi 0, %s19
      %s23 = sphi 0, %s20
      %s24 = sphi 0, %s21
      %s25 = sphi 0, %s22
      %s26 = sphi 0, %s23
      %s27 = sphi 0, %s24
      %s43 = sphi 0, %s45
      %s46 = sphi 0, %s43
      %s47 = sphi 0, %s46
      %s63 = sphi 0, %s47
      %s71 = sphi 0, %s73
      %s74 = sphi 0, %s71
      %s75 = sphi 0, %s74
      %s91 = sphi 0, %s75
      %s97 = sphi 0, %s99
      %s100 = sphi 0, %s97
      %s101 = sphi 0, %s100
      %s117 = sphi 0, %s101
      %s123 = sphi 0, %s125
      %s126 = sphi 0, %s123
      %s127 = sphi 0, %s126
      %s143 = sphi 0, %s127
      %s151 = sphi 0, %s153
      %s154 = sphi 0, %s151
      %s155 = sphi 0, %s154
      %s171 = sphi 0, %s155
      %s179 = sphi 0, %s181
      %s182 = sphi 0, %s179
      %s183 = sphi 0, %s182
      %s199 = sphi 0, %s183
    $region4: #{residual_block_forward.5} parent=1 // loop_header_branch
      %15 = sbr.rel (%p13) target = $region8
    $region5: #{residual_block_forward.5} parent=1 // loop_body
      %s17 = ssub.s32 %s12, 1
      %s18 = ssub.s32 %s12, 2
      %s28 = sadd.s32 1, %s21
      %p29 = scmp.ge.s32.totalorder %s28, 3
      %s30 = scalar_select %p29, 0, %s28
      %s31 = sadd.s32 1, %s20
      %s32 = scalar_select %p29, %s31, %s20
      %p33 = scmp.ge.s32.totalorder %s32, 1
      %s34 = scalar_select %p33, 0, %s32
      %s35 = sadd.s32 1, %s19
      %s36 = scalar_select %p33, %s35, %s19
      %p37 = scmp.ge.s32.totalorder %s36, 1
      %s38 = scalar_select %p37, 0, %s36
      %s39 = ssub.s32 %s19, %s38
      %s40 = ssub.s32 %s21, %s30
      %s41 = sor.u32 %s39, %s40
      %p42 = scmp.eq.s32.totalorder %s41, 0
      %s44 = sadd.s32 %s43, 1
      %s45 = scalar_select %p42, %s43, %s44
      %p48 = pneg %p42
      %p49 = scmp.eq.s32.totalorder %s12, 2
      %p50 = por %p48, %p49
      %p51 = scmp.ne.s32.totalorder %s43, %s46
      %p52 = scmp.eq.s32.totalorder %s12, 0
      %p53 = por %p51, %p52
      %p54 = scmp.ne.s32.totalorder %s43, %s46
      %p55 = scmp.eq.s32.totalorder %s17, 2
      %p56 = por %p54, %p55
      %p57 = scmp.ne.s32.totalorder %s46, %s47
      %p58 = scmp.eq.s32.totalorder %s17, 0
      %p59 = por %p57, %p58
      %p60 = scmp.ne.s32.totalorder %s46, %s47
      %p61 = scmp.eq.s32.totalorder %s18, 2
      %p62 = por %p60, %p61
      %p64 = scmp.ne.s32.totalorder %s47, %s63
      %p65 = scmp.eq.s32.totalorder %s18, 0
      %p66 = por %p64, %p65
      %s67 = ssub.s32 %s21, %s30
      %s68 = ssub.s32 %s20, %s34
      %s69 = sor.u32 %s67, %s68
      %p70 = scmp.eq.s32.totalorder %s69, 0
      %s72 = sadd.s32 %s71, 1
      %s73 = scalar_select %p70, %s71, %s72
      %p76 = pneg %p70
      %p77 = scmp.eq.s32.totalorder %s12, 2
      %p78 = por %p76, %p77
      %p79 = scmp.ne.s32.totalorder %s71, %s74
      %p80 = scmp.eq.s32.totalorder %s12, 0
      %p81 = por %p79, %p80
      %p82 = scmp.ne.s32.totalorder %s71, %s74
      %p83 = scmp.eq.s32.totalorder %s17, 2
      %p84 = por %p82, %p83
      %p85 = scmp.ne.s32.totalorder %s74, %s75
      %p86 = scmp.eq.s32.totalorder %s17, 0
      %p87 = por %p85, %p86
      %p88 = scmp.ne.s32.totalorder %s74, %s75
      %p89 = scmp.eq.s32.totalorder %s18, 2
      %p90 = por %p88, %p89
      %p92 = scmp.ne.s32.totalorder %s75, %s91
      %p93 = scmp.eq.s32.totalorder %s18, 0
      %p94 = por %p92, %p93
      %s95 = ssub.s32 %s20, %s34
      %p96 = scmp.eq.s32.totalorder %s95, 0
      %s98 = sadd.s32 %s97, 1
      %s99 = scalar_select %p96, %s97, %s98
      %p102 = pneg %p96
      %p103 = scmp.eq.s32.totalorder %s12, 2
      %p104 = por %p102, %p103
      %p105 = scmp.ne.s32.totalorder %s97, %s100
      %p106 = scmp.eq.s32.totalorder %s12, 0
      %p107 = por %p105, %p106
      %p108 = scmp.ne.s32.totalorder %s97, %s100
      %p109 = scmp.eq.s32.totalorder %s17, 2
      %p110 = por %p108, %p109
      %p111 = scmp.ne.s32.totalorder %s100, %s101
      %p112 = scmp.eq.s32.totalorder %s17, 0
      %p113 = por %p111, %p112
      %p114 = scmp.ne.s32.totalorder %s100, %s101
      %p115 = scmp.eq.s32.totalorder %s18, 2
      %p116 = por %p114, %p115
      %p118 = scmp.ne.s32.totalorder %s101, %s117
      %p119 = scmp.eq.s32.totalorder %s18, 0
      %p120 = por %p118, %p119
      %s121 = ssub.s32 %s20, %s34
      %p122 = scmp.eq.s32.totalorder %s121, 0
      %s124 = sadd.s32 %s123, 1
      %s125 = scalar_select %p122, %s123, %s124
      %p128 = pneg %p122
      %p129 = scmp.eq.s32.totalorder %s12, 2
      %p130 = por %p128, %p129
      %p131 = scmp.ne.s32.totalorder %s123, %s126
      %p132 = scmp.eq.s32.totalorder %s12, 0
      %p133 = por %p131, %p132
      %p134 = scmp.ne.s32.totalorder %s123, %s126
      %p135 = scmp.eq.s32.totalorder %s17, 2
      %p136 = por %p134, %p135
      %p137 = scmp.ne.s32.totalorder %s126, %s127
      %p138 = scmp.eq.s32.totalorder %s17, 0
      %p139 = por %p137, %p138
      %p140 = scmp.ne.s32.totalorder %s126, %s127
      %p141 = scmp.eq.s32.totalorder %s18, 2
      %p142 = por %p140, %p141
      %p144 = scmp.ne.s32.totalorder %s127, %s143
      %p145 = scmp.eq.s32.totalorder %s18, 0
      %p146 = por %p144, %p145
      %s147 = ssub.s32 %s19, %s38
      %s148 = ssub.s32 %s20, %s34
      %s149 = sor.u32 %s147, %s148
      %p150 = scmp.eq.s32.totalorder %s149, 0
      %s152 = sadd.s32 %s151, 1
      %s153 = scalar_select %p150, %s151, %s152
      %p156 = pneg %p150
      %p157 = scmp.eq.s32.totalorder %s12, 2
      %p158 = por %p156, %p157
      %p159 = scmp.ne.s32.totalorder %s151, %s154
      %p160 = scmp.eq.s32.totalorder %s12, 0
      %p161 = por %p159, %p160
      %p162 = scmp.ne.s32.totalorder %s151, %s154
      %p163 = scmp.eq.s32.totalorder %s17, 2
      %p164 = por %p162, %p163
      %p165 = scmp.ne.s32.totalorder %s154, %s155
      %p166 = scmp.eq.s32.totalorder %s17, 0
      %p167 = por %p165, %p166
      %p168 = scmp.ne.s32.totalorder %s154, %s155
      %p169 = scmp.eq.s32.totalorder %s18, 2
      %p170 = por %p168, %p169
      %p172 = scmp.ne.s32.totalorder %s155, %s171
      %p173 = scmp.eq.s32.totalorder %s18, 0
      %p174 = por %p172, %p173
      %s175 = ssub.s32 %s19, %s38
      %s176 = ssub.s32 %s20, %s34
      %s177 = sor.u32 %s175, %s176
      %p178 = scmp.eq.s32.totalorder %s177, 0
      %s180 = sadd.s32 %s179, 1
      %s181 = scalar_select %p178, %s179, %s180
      %p184 = pneg %p178
      %p185 = scmp.eq.s32.totalorder %s12, 2
      %p186 = por %p184, %p185
      %p187 = scmp.ne.s32.totalorder %s179, %s182
      %p188 = scmp.eq.s32.totalorder %s12, 0
      %p189 = por %p187, %p188
      %p190 = scmp.ne.s32.totalorder %s179, %s182
      %p191 = scmp.eq.s32.totalorder %s17, 2
      %p192 = por %p190, %p191
      %p193 = scmp.ne.s32.totalorder %s182, %s183
      %p194 = scmp.eq.s32.totalorder %s17, 0
      %p195 = por %p193, %p194
      %p196 = scmp.ne.s32.totalorder %s182, %s183
      %p197 = scmp.eq.s32.totalorder %s18, 2
      %p198 = por %p196, %p197
      %p200 = scmp.ne.s32.totalorder %s183, %s199
      %p201 = scmp.eq.s32.totalorder %s18, 0
      %p202 = por %p200, %p201
      %p203 = scmp.le.s32.totalorder 1, %s12
      %p204 = scmp.lt.s32.totalorder %s12, 4
      %p205 = pnand %p203, %p204
      %p206 = pneg %p205
      // Predicated region
      $region9: #{residual_block_forward.5} parent=5 // pred_check
        _
      $region10: #{residual_block_forward.5} parent=5 // pred_check_branch
        %208 = sbr.rel (%p205) target = $region12
      $region11: #{residual_block_forward.5} parent=5 // pred_region
        %s209 = ssub.s32 %s12, 1
        // Predicated region
        $region13: #{residual_block_forward.5} parent=11 // pred_check
          %p210 = pneg %p113
        $region14: #{residual_block_forward.5} parent=11 // pred_check_branch
          %212 = sbr.rel (%p210) target = $region16
        $region15: #{residual_block_forward.5} parent=11 // pred_region
          %p213 = scmp.lt.s32.totalorder %s23, 0
          %s214 = scalar_select %p213, %s23, 0
          %s215 = scalar_lea.vmem %s2, %s214
        $region16: #{residual_block_forward.5} parent=11 // pred_fallthru
          _
        // Predicated region
        $region17: #{residual_block_forward.5} parent=11 // pred_check
          %p216 = pneg %p139
        $region18: #{residual_block_forward.5} parent=11 // pred_check_branch
          %218 = sbr.rel (%p216) target = $region20
        $region19: #{residual_block_forward.5} parent=11 // pred_region
          %p219 = scmp.lt.s32.totalorder %s23, 0
          %s220 = scalar_select %p219, %s23, 0
          %s221 = scalar_lea.vmem %s3, %s220
        $region20: #{residual_block_forward.5} parent=11 // pred_fallthru
          _
        // Predicated region
        $region21: #{residual_block_forward.5} parent=11 // pred_check
          %p222 = pneg %p167
        $region22: #{residual_block_forward.5} parent=11 // pred_check_branch
          %224 = sbr.rel (%p222) target = $region24
        $region23: #{residual_block_forward.5} parent=11 // pred_region
          %s225 = smul.u32 16, %s22
          %p226 = scmp.lt.s32.totalorder %s225, 15
          %s227 = scalar_select %p226, %s225, 15
          %p228 = scmp.lt.s32.totalorder %s23, 0
          %s229 = scalar_select %p228, %s23, 0
          %s230 = sadd.s32 %s229, %s227
          %s231 = smul.addr %s230, 4
          %s232 = scalar_lea.vmem %s4, %s231
          %s233 = smul.u32 16, %s22
        $region24: #{residual_block_forward.5} parent=11 // pred_fallthru
          _
      $region12: #{residual_block_forward.5} parent=5 // pred_fallthru
        _
      %p234 = scmp.lt.s32.totalorder %s12, 3
      // Predicated region
      $region25: #{residual_block_forward.5} parent=5 // pred_check
        %p235 = pneg %p234
      $region26: #{residual_block_forward.5} parent=5 // pred_check_branch
        %237 = sbr.rel (%p235) target = $region28
      $region27: #{residual_block_forward.5} parent=5 // pred_region
        // Predicated region
        $region29: #{residual_block_forward.5} parent=27 // pred_check
          %p238 = pneg %p53
        $region30: #{residual_block_forward.5} parent=27 // pred_check_branch
          %240 = sbr.rel (%p238) target = $region32
        $region31: #{residual_block_forward.5} parent=27 // pred_region
          %s241 = sand.u32 %s43, 1
          %s242 = sand.u32 %s43, 1
          %s243 = smul.addr %s242, 192
          %s244 = scalar_lea.vmem [#allocation3], %s243
          %s245 = smul.u32 16, %s19
          %s246 = smul.u32 3, %s21
          %s247 = smul.addr %s245, 9
          %s248 = sadd.s32 %s246, %s247
          %s249 = smul.addr %s248, 4
          %s250 = scalar_lea.vmem %s0, %s249
          // Predicated region
          $region33: #{residual_block_forward.5} parent=31 // pred_check
            _
          $region34: #{residual_block_forward.5} parent=31 // pred_check_branch
            %252 = sbr.rel (0) target = $region36
          $region35: #{residual_block_forward.5} parent=31 // pred_region
            // Predicated region
            $region37: #{residual_block_forward.5} parent=35 // pred_check
              _
            $region38: #{residual_block_forward.5} parent=35 // pred_check_branch
              %254 = sbr.rel (0) target = $region40
            $region39: #{residual_block_forward.5} parent=35 // pred_region
              %s255 = scalar_lea.vmem %s250, 8
              %s256 = scalar_lea.vmem %s244, 8 [#allocation3]
              loop: start=0, step=1, limit=1
              $region41: #{residual_block_forward.5} parent=39 // loop_pre_header
                _
              $region42: #{residual_block_forward.5} parent=39 // loop_header
                %s258 = sphi 0, %s262
                %p259 = scmp.ge.s32.totalorder %s258, 1
                %s263 = sphi %s250, %s250
                %s264 = sphi %s244, %s244
              $region43: #{residual_block_forward.5} parent=39 // loop_header_branch
                %261 = sbr.rel (%p259) target = $region47
              $region44: #{residual_block_forward.5} parent=39 // loop_body
                %v265 = vld [vmem:[%s263] sm:$0xff]
                %266 = vst [vmem:[%s264] sm:$0xff] %v265
                %v267 = vld [vmem:[%s263 + $0x24] sm:$0xff]
                %268 = vst [vmem:[%s264 + $0xc] sm:$0xff] %v267
                %v269 = vld [vmem:[%s263 + $0x48] sm:$0xff]
                %270 = vst [vmem:[%s264 + $0x18] sm:$0xff] %v269
                %v271 = vld [vmem:[%s263 + $0x6c] sm:$0xff]
                %272 = vst [vmem:[%s264 + $0x24] sm:$0xff] %v271
                %v273 = vld [vmem:[%s263 + $0x90] sm:$0xff]
                %274 = vst [vmem:[%s264 + $0x30] sm:$0xff] %v273
                %v275 = vld [vmem:[%s263 + $0xb4] sm:$0xff]
                %276 = vst [vmem:[%s264 + $0x3c] sm:$0xff] %v275
                %v277 = vld [vmem:[%s263 + $0xd8] sm:$0xff]
                %278 = vst [vmem:[%s264 + $0x48] sm:$0xff] %v277
                %v279 = vld [vmem:[%s263 + $0xfc] sm:$0xff]
                %280 = vst [vmem:[%s264 + $0x54] sm:$0xff] %v279
                %v281 = vld [vmem:[%s263 + $0x120] sm:$0xff]
                %282 = vst [vmem:[%s264 + $0x60] sm:$0xff] %v281
                %v283 = vld [vmem:[%s263 + $0x144] sm:$0xff]
                %284 = vst [vmem:[%s264 + $0x6c] sm:$0xff] %v283
                %v285 = vld [vmem:[%s263 + $0x168] sm:$0xff]
                %286 = vst [vmem:[%s264 + $0x78] sm:$0xff] %v285
                %v287 = vld [vmem:[%s263 + $0x18c] sm:$0xff]
                %288 = vst [vmem:[%s264 + $0x84] sm:$0xff] %v287
                %v289 = vld [vmem:[%s263 + $0x1b0] sm:$0xff]
                %290 = vst [vmem:[%s264 + $0x90] sm:$0xff] %v289
                %v291 = vld [vmem:[%s263 + $0x1d4] sm:$0xff]
                %292 = vst [vmem:[%s264 + $0x9c] sm:$0xff] %v291
                %v293 = vld [vmem:[%s263 + $0x1f8] sm:$0xff]
                %294 = vst [vmem:[%s264 + $0xa8] sm:$0xff] %v293
                %v295 = vld [vmem:[%s263 + $0x21c] sm:$0xff]
                %296 = vst [vmem:[%s264 + $0xb4] sm:$0xff] %v295
              $region45: #{residual_block_forward.5} parent=39 // loop_footer
                %s262 = sadd.s32 1, %s258
              $region46: #{residual_block_forward.5} parent=39 // loop_footer_branch
                %257 = sbr.rel target = $region42
              $region47: #{residual_block_forward.5} parent=39 // loop_exit
                _
              %s298 = ssub.s32 16, 1
              loop: start=0, step=1, limit=1
              $region48: #{residual_block_forward.5} parent=39 // loop_pre_header
                _
              $region49: #{residual_block_forward.5} parent=39 // loop_header
                %s300 = sphi 0, %s304
                %p301 = scmp.ge.s32.totalorder %s300, 1
                %s305 = sphi %s255, %s255
                %s306 = sphi %s256, %s256
              $region50: #{residual_block_forward.5} parent=39 // loop_header_branch
                %303 = sbr.rel (%p301) target = $region54
              $region51: #{residual_block_forward.5} parent=39 // loop_body
                %v307 = vld [vmem:[%s305] sm:%s298]
                %308 = vst [vmem:[%s306] sm:%s298] %v307
                %v309 = vld [vmem:[%s305 + $0x24] sm:%s298]
                %310 = vst [vmem:[%s306 + $0xc] sm:%s298] %v309
                %v311 = vld [vmem:[%s305 + $0x48] sm:%s298]
                %312 = vst [vmem:[%s306 + $0x18] sm:%s298] %v311
                %v313 = vld [vmem:[%s305 + $0x6c] sm:%s298]
                %314 = vst [vmem:[%s306 + $0x24] sm:%s298] %v313
                %v315 = vld [vmem:[%s305 + $0x90] sm:%s298]
                %316 = vst [vmem:[%s306 + $0x30] sm:%s298] %v315
                %v317 = vld [vmem:[%s305 + $0xb4] sm:%s298]
                %318 = vst [vmem:[%s306 + $0x3c] sm:%s298] %v317
                %v319 = vld [vmem:[%s305 + $0xd8] sm:%s298]
                %320 = vst [vmem:[%s306 + $0x48] sm:%s298] %v319
                %v321 = vld [vmem:[%s305 + $0xfc] sm:%s298]
                %322 = vst [vmem:[%s306 + $0x54] sm:%s298] %v321
                %v323 = vld [vmem:[%s305 + $0x120] sm:%s298]
                %324 = vst [vmem:[%s306 + $0x60] sm:%s298] %v323
                %v325 = vld [vmem:[%s305 + $0x144] sm:%s298]
                %326 = vst [vmem:[%s306 + $0x6c] sm:%s298] %v325
                %v327 = vld [vmem:[%s305 + $0x168] sm:%s298]
                %328 = vst [vmem:[%s306 + $0x78] sm:%s298] %v327
                %v329 = vld [vmem:[%s305 + $0x18c] sm:%s298]
                %330 = vst [vmem:[%s306 + $0x84] sm:%s298] %v329
                %v331 = vld [vmem:[%s305 + $0x1b0] sm:%s298]
                %332 = vst [vmem:[%s306 + $0x90] sm:%s298] %v331
                %v333 = vld [vmem:[%s305 + $0x1d4] sm:%s298]
                %334 = vst [vmem:[%s306 + $0x9c] sm:%s298] %v333
                %v335 = vld [vmem:[%s305 + $0x1f8] sm:%s298]
                %336 = vst [vmem:[%s306 + $0xa8] sm:%s298] %v335
                %v337 = vld [vmem:[%s305 + $0x21c] sm:%s298]
                %338 = vst [vmem:[%s306 + $0xb4] sm:%s298] %v337
              $region52: #{residual_block_forward.5} parent=39 // loop_footer
                %s304 = sadd.s32 1, %s300
              $region53: #{residual_block_forward.5} parent=39 // loop_footer_branch
                %299 = sbr.rel target = $region49
              $region54: #{residual_block_forward.5} parent=39 // loop_exit
                _
            $region40: #{residual_block_forward.5} parent=35 // pred_fallthru
              _
          $region36: #{residual_block_forward.5} parent=31 // pred_fallthru
            _
          %339 = vnop
        $region32: #{residual_block_forward.5} parent=27 // pred_fallthru
          _
        // Predicated region
        $region55: #{residual_block_forward.5} parent=27 // pred_check
          %p340 = pneg %p81
        $region56: #{residual_block_forward.5} parent=27 // pred_check_branch
          %342 = sbr.rel (%p340) target = $region58
        $region57: #{residual_block_forward.5} parent=27 // pred_region
          %s343 = smul.u32 48, %s21
          %p344 = scmp.lt.s32.totalorder %s343, 143
          %s345 = scalar_select %p344, %s343, 143
          %p346 = scmp.lt.s32.totalorder %s20, 0
          %s347 = scalar_select %p346, %s20, 0
          %s348 = sadd.s32 %s347, %s345
          %s349 = smul.addr %s348, 4
          %s350 = scalar_lea.vmem %s1, %s349
          %s351 = smul.u32 48, %s21
        $region58: #{residual_block_forward.5} parent=27 // pred_fallthru
          _
      $region28: #{residual_block_forward.5} parent=5 // pred_fallthru
        _
      %p352 = scmp.le.s32.totalorder 1, %s12
      %p353 = scmp.lt.s32.totalorder %s12, 4
      %p354 = pnand %p352, %p353
      %p355 = pneg %p354
      // Predicated region
      $region59: #{residual_block_forward.5} parent=5 // pred_check
        _
      $region60: #{residual_block_forward.5} parent=5 // pred_check_branch
        %357 = sbr.rel (%p354) target = $region62
      $region61: #{residual_block_forward.5} parent=5 // pred_region
        %s358 = ssub.s32 %s12, 1
        %s359 = sand.u32 %s46, 1
        %s360 = sand.u32 %s46, 1
        %s361 = smul.addr %s360, 192
        %s362 = scalar_lea.vmem [#allocation3], %s361
        // Predicated region
        $region63: #{residual_block_forward.5} parent=61 // pred_check
          %p363 = pneg %p59
        $region64: #{residual_block_forward.5} parent=61 // pred_check_branch
          %365 = sbr.rel (%p363) target = $region66
        $region65: #{residual_block_forward.5} parent=61 // pred_region
          _
        $region66: #{residual_block_forward.5} parent=61 // pred_fallthru
          _
        %s366 = sand.u32 %s46, 1
        %s367 = sand.u32 %s46, 1
        %s368 = smul.addr %s367, 192
        %s369 = scalar_lea.vmem [#allocation3], %s368
        %p370 = pneg %p59
        %p371 = pneg %p56
        %s372 = smul.u32 48, %s24
        %p373 = scmp.lt.s32.totalorder %s372, 143
        %s374 = scalar_select %p373, %s372, 143
        %p375 = scmp.lt.s32.totalorder %s23, 0
        %s376 = scalar_select %p375, %s23, 0
        %s377 = sadd.s32 %s376, %s374
        %s378 = smul.addr %s377, 4
        %s379 = scalar_lea.vmem %s1, %s378
        %p380 = pneg %p87
        %p381 = pneg %p84
        %p382 = scmp.lt.s32.totalorder %s23, 0
        %s383 = scalar_select %p382, %s23, 0
        %s384 = scalar_lea.vmem %s2, %s383
        %p385 = pneg %p113
        %p386 = pneg %p110
        %p387 = scmp.lt.s32.totalorder %s23, 0
        %s388 = scalar_select %p387, %s23, 0
        %s389 = scalar_lea.vmem %s3, %s388
        %p390 = pneg %p139
        %p391 = pneg %p136
        %s392 = smul.u32 16, %s22
        %p393 = scmp.lt.s32.totalorder %s392, 15
        %s394 = scalar_select %p393, %s392, 15
        %p395 = scmp.lt.s32.totalorder %s23, 0
        %s396 = scalar_select %p395, %s23, 0
        %s397 = sadd.s32 %s396, %s394
        %s398 = smul.addr %s397, 4
        %s399 = scalar_lea.vmem %s4, %s398
        %p400 = pneg %p167
        %p401 = pneg %p164
        %p402 = pneg %p195
        %p403 = pneg %p192
        %s404 = smul.u32 16, %s22
        %s405 = smul.u32 3, %s24
        %s406 = smul.u32 48, %s24
        %p407 = scmp.lt.s32.totalorder %s406, 143
        %s408 = scalar_select %p407, %s406, 143
        %p409 = scmp.lt.s32.totalorder %s23, 0
        %s410 = scalar_select %p409, %s23, 0
        %s411 = sadd.s32 %s410, %s408
        %s412 = smul.addr %s411, 4
        %s413 = scalar_lea.vmem %s1, %s412
        %s414 = smul.u32 48, %s24
        %p415 = scmp.lt.s32.totalorder %s23, 0
        %s416 = scalar_select %p415, %s23, 0
        %s417 = scalar_lea.vmem %s2, %s416
        %p418 = scmp.lt.s32.totalorder %s23, 0
        %s419 = scalar_select %p418, %s23, 0
        %s420 = scalar_lea.vmem %s3, %s419
        %s421 = smul.u32 16, %s22
        %p422 = scmp.lt.s32.totalorder %s421, 15
        %s423 = scalar_select %p422, %s421, 15
        %p424 = scmp.lt.s32.totalorder %s23, 0
        %s425 = scalar_select %p424, %s23, 0
        %s426 = sadd.s32 %s425, %s423
        %s427 = smul.addr %s426, 4
        %s428 = scalar_lea.vmem %s4, %s427
        %s429 = smul.u32 16, %s22
        %s430 = smul.u32 16, %s22
        %p432 = scmp.eq.s32.totalorder %s24, 0
        // Predicated region
        $region67: #{residual_block_forward.5} parent=61 // pred_check
          %p433 = pneg %p432
        $region68: #{residual_block_forward.5} parent=61 // pred_check_branch
          %435 = sbr.rel (%p433) target = $region70
        $region69: #{residual_block_forward.5} parent=61 // pred_region
          %436 = vst [vmem:[#allocation2] sm:$0xff] 0.0
          %437 = vst [vmem:[#allocation2 + $0x8] sm:$0xff] 0.0
          %438 = vst [vmem:[#allocation2 + $0x10] sm:$0xff] 0.0
          %439 = vst [vmem:[#allocation2 + $0x18] sm:$0xff] 0.0
          %440 = vst [vmem:[#allocation2 + $0x20] sm:$0xff] 0.0
          %441 = vst [vmem:[#allocation2 + $0x28] sm:$0xff] 0.0
          %442 = vst [vmem:[#allocation2 + $0x30] sm:$0xff] 0.0
          %443 = vst [vmem:[#allocation2 + $0x38] sm:$0xff] 0.0
          %444 = vst [vmem:[#allocation2 + $0x40] sm:$0xff] 0.0
          %445 = vst [vmem:[#allocation2 + $0x48] sm:$0xff] 0.0
          %446 = vst [vmem:[#allocation2 + $0x50] sm:$0xff] 0.0
          %447 = vst [vmem:[#allocation2 + $0x58] sm:$0xff] 0.0
          %448 = vst [vmem:[#allocation2 + $0x60] sm:$0xff] 0.0
          %449 = vst [vmem:[#allocation2 + $0x68] sm:$0xff] 0.0
          %450 = vst [vmem:[#allocation2 + $0x70] sm:$0xff] 0.0
          %451 = vst [vmem:[#allocation2 + $0x78] sm:$0xff] 0.0
        $region70: #{residual_block_forward.5} parent=61 // pred_fallthru
          _
        %v452 = vld [vmem:[#allocation2] sm:$0xff]
        %v453 = vld [vmem:[#allocation2 + $0x8] sm:$0xff]
        %v454 = vld [vmem:[#allocation2 + $0x10] sm:$0xff]
        %v455 = vld [vmem:[#allocation2 + $0x18] sm:$0xff]
        %v456 = vld [vmem:[#allocation2 + $0x20] sm:$0xff]
        %v457 = vld [vmem:[#allocation2 + $0x28] sm:$0xff]
        %v458 = vld [vmem:[#allocation2 + $0x30] sm:$0xff]
        %v459 = vld [vmem:[#allocation2 + $0x38] sm:$0xff]
        %v460 = vld [vmem:[#allocation2 + $0x40] sm:$0xff]
        %v461 = vld [vmem:[#allocation2 + $0x48] sm:$0xff]
        %v462 = vld [vmem:[#allocation2 + $0x50] sm:$0xff]
        %v463 = vld [vmem:[#allocation2 + $0x58] sm:$0xff]
        %v464 = vld [vmem:[#allocation2 + $0x60] sm:$0xff]
        %v465 = vld [vmem:[#allocation2 + $0x68] sm:$0xff]
        %v466 = vld [vmem:[#allocation2 + $0x70] sm:$0xff]
        %v467 = vld [vmem:[#allocation2 + $0x78] sm:$0xff]
        %v468 = vld [vmem:[%s362] sm:$0xff]
        %v469 = vld [vmem:[%s362 + $0x8] sm:$0xf]
        %v470 = vld [vmem:[%s362 + $0xc] sm:$0xff]
        %v471 = vld [vmem:[%s362 + $0x14] sm:$0xf]
        %v472 = vld [vmem:[%s362 + $0x18] sm:$0xff]
        %v473 = vld [vmem:[%s362 + $0x20] sm:$0xf]
        %v474 = vld [vmem:[%s362 + $0x24] sm:$0xff]
        %v475 = vld [vmem:[%s362 + $0x2c] sm:$0xf]
        %v476 = vld [vmem:[%s362 + $0x30] sm:$0xff]
        %v477 = vld [vmem:[%s362 + $0x38] sm:$0xf]
        %v478 = vld [vmem:[%s362 + $0x3c] sm:$0xff]
        %v479 = vld [vmem:[%s362 + $0x44] sm:$0xf]
        %v480 = vld [vmem:[%s362 + $0x48] sm:$0xff]
        %v481 = vld [vmem:[%s362 + $0x50] sm:$0xf]
        %v482 = vld [vmem:[%s362 + $0x54] sm:$0xff]
        %v483 = vld [vmem:[%s362 + $0x5c] sm:$0xf]
        %v484 = vld [vmem:[%s362 + $0x60] sm:$0xff]
        %v485 = vld [vmem:[%s362 + $0x68] sm:$0xf]
        %v486 = vld [vmem:[%s362 + $0x6c] sm:$0xff]
        %v487 = vld [vmem:[%s362 + $0x74] sm:$0xf]
        %v488 = vld [vmem:[%s362 + $0x78] sm:$0xff]
        %v489 = vld [vmem:[%s362 + $0x80] sm:$0xf]
        %v490 = vld [vmem:[%s362 + $0x84] sm:$0xff]
        %v491 = vld [vmem:[%s362 + $0x8c] sm:$0xf]
        %v492 = vld [vmem:[%s362 + $0x90] sm:$0xff]
        %v493 = vld [vmem:[%s362 + $0x98] sm:$0xf]
        %v494 = vld [vmem:[%s362 + $0x9c] sm:$0xff]
        %v495 = vld [vmem:[%s362 + $0xa4] sm:$0xf]
        %v496 = vld [vmem:[%s362 + $0xa8] sm:$0xff]
        %v497 = vld [vmem:[%s362 + $0xb0] sm:$0xf]
        %v498 = vld [vmem:[%s362 + $0xb4] sm:$0xff]
        %v499 = vld [vmem:[%s362 + $0xbc] sm:$0xf]
        %v500 = vld [vmem:[%s413] sm:$0xf]
        %v501 = vld [vmem:[%s413 + $0x4] sm:$0xf]
        %v502 = vld [vmem:[%s413 + $0x8] sm:$0xf]
        %v503 = vld [vmem:[%s413 + $0xc] sm:$0xf]
        %v504 = vld [vmem:[%s413 + $0x10] sm:$0xf]
        %v505 = vld [vmem:[%s413 + $0x14] sm:$0xf]
        %v506 = vld [vmem:[%s413 + $0x18] sm:$0xf]
        %v507 = vld [vmem:[%s413 + $0x1c] sm:$0xf]
        %v508 = vld [vmem:[%s413 + $0x20] sm:$0xf]
        %v509 = vld [vmem:[%s413 + $0x24] sm:$0xf]
        %v510 = vld [vmem:[%s413 + $0x28] sm:$0xf]
        %v511 = vld [vmem:[%s413 + $0x2c] sm:$0xf]
        %v512 = vld [vmem:[%s413 + $0x30] sm:$0xf]
        %v513 = vld [vmem:[%s413 + $0x34] sm:$0xf]
        %v514 = vld [vmem:[%s413 + $0x38] sm:$0xf]
        %v515 = vld [vmem:[%s413 + $0x3c] sm:$0xf]
        %v516 = vld [vmem:[%s413 + $0x40] sm:$0xf]
        %v517 = vld [vmem:[%s413 + $0x44] sm:$0xf]
        %v518 = vld [vmem:[%s413 + $0x48] sm:$0xf]
        %v519 = vld [vmem:[%s413 + $0x4c] sm:$0xf]
        %v520 = vld [vmem:[%s413 + $0x50] sm:$0xf]
        %v521 = vld [vmem:[%s413 + $0x54] sm:$0xf]
        %v522 = vld [vmem:[%s413 + $0x58] sm:$0xf]
        %v523 = vld [vmem:[%s413 + $0x5c] sm:$0xf]
        %v524 = vld [vmem:[%s413 + $0x60] sm:$0xf]
        %v525 = vld [vmem:[%s413 + $0x64] sm:$0xf]
        %v526 = vld [vmem:[%s413 + $0x68] sm:$0xf]
        %v527 = vld [vmem:[%s413 + $0x6c] sm:$0xf]
        %v528 = vld [vmem:[%s413 + $0x70] sm:$0xf]
        %v529 = vld [vmem:[%s413 + $0x74] sm:$0xf]
        %v530 = vld [vmem:[%s413 + $0x78] sm:$0xf]
        %v531 = vld [vmem:[%s413 + $0x7c] sm:$0xf]
        %v532 = vld [vmem:[%s413 + $0x80] sm:$0xf]
        %v533 = vld [vmem:[%s413 + $0x84] sm:$0xf]
        %v534 = vld [vmem:[%s413 + $0x88] sm:$0xf]
        %v535 = vld [vmem:[%s413 + $0x8c] sm:$0xf]
        %v536 = vld [vmem:[%s413 + $0x90] sm:$0xf]
        %v537 = vld [vmem:[%s413 + $0x94] sm:$0xf]
        %v538 = vld [vmem:[%s413 + $0x98] sm:$0xf]
        %v539 = vld [vmem:[%s413 + $0x9c] sm:$0xf]
        %v540 = vld [vmem:[%s413 + $0xa0] sm:$0xf]
        %v541 = vld [vmem:[%s413 + $0xa4] sm:$0xf]
        %v542 = vld [vmem:[%s413 + $0xa8] sm:$0xf]
        %v543 = vld [vmem:[%s413 + $0xac] sm:$0xf]
        %v544 = vld [vmem:[%s413 + $0xb0] sm:$0xf]
        %v545 = vld [vmem:[%s413 + $0xb4] sm:$0xf]
        %v546 = vld [vmem:[%s413 + $0xb8] sm:$0xf]
        %v547 = vld [vmem:[%s413 + $0xbc] sm:$0xf]
        %v580 = vunpack.c.l.b16 %v468
        %v581 = vunpack.c.h.b16 %v468
        %v582 = vunpack.c.l.b16 %v469
        %v583 = vunpack.c.l.b16 %v470
        %v584 = vunpack.c.h.b16 %v470
        %v585 = vunpack.c.l.b16 %v471
        %v586 = vunpack.c.l.b16 %v472
        %v587 = vunpack.c.h.b16 %v472
        %v588 = vunpack.c.l.b16 %v473
        %v589 = vunpack.c.l.b16 %v474
        %v590 = vunpack.c.h.b16 %v474
        %v591 = vunpack.c.l.b16 %v475
        %v592 = vunpack.c.l.b16 %v476
        %v593 = vunpack.c.h.b16 %v476
        %v594 = vunpack.c.l.b16 %v477
        %v595 = vunpack.c.l.b16 %v478
        %v596 = vunpack.c.h.b16 %v478
        %v597 = vunpack.c.l.b16 %v479
        %v598 = vunpack.c.l.b16 %v480
        %v599 = vunpack.c.h.b16 %v480
        %v600 = vunpack.c.l.b16 %v481
        %v601 = vunpack.c.l.b16 %v482
        %v602 = vunpack.c.h.b16 %v482
        %v603 = vunpack.c.l.b16 %v483
        %v604 = vunpack.c.l.b16 %v484
        %v605 = vunpack.c.h.b16 %v484
        %v606 = vunpack.c.l.b16 %v485
        %v607 = vunpack.c.l.b16 %v486
        %v608 = vunpack.c.h.b16 %v486
        %v609 = vunpack.c.l.b16 %v487
        %v610 = vunpack.c.l.b16 %v488
        %v611 = vunpack.c.h.b16 %v488
        %v612 = vunpack.c.l.b16 %v489
        %v613 = vunpack.c.l.b16 %v490
        %v614 = vunpack.c.h.b16 %v490
        %v615 = vunpack.c.l.b16 %v491
        %v616 = vunpack.c.l.b16 %v492
        %v617 = vunpack.c.h.b16 %v492
        %v618 = vunpack.c.l.b16 %v493
        %v619 = vunpack.c.l.b16 %v494
        %v620 = vunpack.c.h.b16 %v494
        %v621 = vunpack.c.l.b16 %v495
        %v622 = vunpack.c.l.b16 %v496
        %v623 = vunpack.c.h.b16 %v496
        %v624 = vunpack.c.l.b16 %v497
        %v625 = vunpack.c.l.b16 %v498
        %v626 = vunpack.c.h.b16 %v498
        %v627 = vunpack.c.l.b16 %v499
        %v628 = vpack.c.b16 %v583, %v580
        %v629 = vpack.c.b16 %v584, %v581
        %v630 = vpack.c.b16 %v585, %v582
        %v631 = vpack.c.b16 %v589, %v586
        %v632 = vpack.c.b16 %v590, %v587
        %v633 = vpack.c.b16 %v591, %v588
        %v634 = vpack.c.b16 %v595, %v592
        %v635 = vpack.c.b16 %v596, %v593
        %v636 = vpack.c.b16 %v597, %v594
        %v637 = vpack.c.b16 %v601, %v598
        %v638 = vpack.c.b16 %v602, %v599
        %v639 = vpack.c.b16 %v603, %v600
        %v640 = vpack.c.b16 %v607, %v604
        %v641 = vpack.c.b16 %v608, %v605
        %v642 = vpack.c.b16 %v609, %v606
        %v643 = vpack.c.b16 %v613, %v610
        %v644 = vpack.c.b16 %v614, %v611
        %v645 = vpack.c.b16 %v615, %v612
        %v646 = vpack.c.b16 %v619, %v616
        %v647 = vpack.c.b16 %v620, %v617
        %v648 = vpack.c.b16 %v621, %v618
        %v649 = vpack.c.b16 %v625, %v622
        %v650 = vpack.c.b16 %v626, %v623
        %v651 = vpack.c.b16 %v627, %v624
        %v724 = vunpack.c.l.b16 %v500
        %v725 = vunpack.c.l.b16 %v501
        %v726 = vunpack.c.l.b16 %v502
        %v727 = vunpack.c.l.b16 %v503
        %v728 = vunpack.c.l.b16 %v504
        %v729 = vunpack.c.l.b16 %v505
        %v730 = vunpack.c.l.b16 %v506
        %v731 = vunpack.c.l.b16 %v507
        %v732 = vunpack.c.l.b16 %v508
        %v733 = vunpack.c.l.b16 %v509
        %v734 = vunpack.c.l.b16 %v510
        %v735 = vunpack.c.l.b16 %v511
        %v736 = vunpack.c.l.b16 %v512
        %v737 = vunpack.c.l.b16 %v513
        %v738 = vunpack.c.l.b16 %v514
        %v739 = vunpack.c.l.b16 %v515
        %v740 = vunpack.c.l.b16 %v516
        %v741 = vunpack.c.l.b16 %v517
        %v742 = vunpack.c.l.b16 %v518
        %v743 = vunpack.c.l.b16 %v519
        %v744 = vunpack.c.l.b16 %v520
        %v745 = vunpack.c.l.b16 %v521
        %v746 = vunpack.c.l.b16 %v522
        %v747 = vunpack.c.l.b16 %v523
        %v748 = vunpack.c.l.b16 %v524
        %v749 = vunpack.c.l.b16 %v525
        %v750 = vunpack.c.l.b16 %v526
        %v751 = vunpack.c.l.b16 %v527
        %v752 = vunpack.c.l.b16 %v528
        %v753 = vunpack.c.l.b16 %v529
        %v754 = vunpack.c.l.b16 %v530
        %v755 = vunpack.c.l.b16 %v531
        %v756 = vunpack.c.l.b16 %v532
        %v757 = vunpack.c.l.b16 %v533
        %v758 = vunpack.c.l.b16 %v534
        %v759 = vunpack.c.l.b16 %v535
        %v760 = vunpack.c.l.b16 %v536
        %v761 = vunpack.c.l.b16 %v537
        %v762 = vunpack.c.l.b16 %v538
        %v763 = vunpack.c.l.b16 %v539
        %v764 = vunpack.c.l.b16 %v540
        %v765 = vunpack.c.l.b16 %v541
        %v766 = vunpack.c.l.b16 %v542
        %v767 = vunpack.c.l.b16 %v543
        %v768 = vunpack.c.l.b16 %v544
        %v769 = vunpack.c.l.b16 %v545
        %v770 = vunpack.c.l.b16 %v546
        %v771 = vunpack.c.l.b16 %v547
        %v772 = vpack.c.b16 %v725, %v724
        %v773 = vpack.c.b16 %v727, %v726
        %v774 = vpack.c.b16 %v729, %v728
        %v775 = vpack.c.b16 %v731, %v730
        %v776 = vpack.c.b16 %v733, %v732
        %v777 = vpack.c.b16 %v735, %v734
        %v778 = vpack.c.b16 %v737, %v736
        %v779 = vpack.c.b16 %v739, %v738
        %v780 = vpack.c.b16 %v741, %v740
        %v781 = vpack.c.b16 %v743, %v742
        %v782 = vpack.c.b16 %v745, %v744
        %v783 = vpack.c.b16 %v747, %v746
        %v784 = vpack.c.b16 %v749, %v748
        %v785 = vpack.c.b16 %v751, %v750
        %v786 = vpack.c.b16 %v753, %v752
        %v787 = vpack.c.b16 %v755, %v754
        %v788 = vpack.c.b16 %v757, %v756
        %v789 = vpack.c.b16 %v759, %v758
        %v790 = vpack.c.b16 %v761, %v760
        %v791 = vpack.c.b16 %v763, %v762
        %v792 = vpack.c.b16 %v765, %v764
        %v793 = vpack.c.b16 %v767, %v766
        %v794 = vpack.c.b16 %v769, %v768
        %v795 = vpack.c.b16 %v771, %v770
        %820 = vmatprep.subr.bf16.mxu0 0
        %821 = vmatpush1.bf16.msra.mxu0 %v779
        %822 = vmatprep.subr.bf16.mxu0 0
        %823 = vmatpush1.bf16.msra.mxu0 %v778
        %824 = vmatprep.subr.bf16.mxu0 0
        %825 = vmatpush1.bf16.msra.mxu0 %v777
        %826 = vmatprep.subr.bf16.mxu0 0
        %827 = vmatpush1.bf16.msra.mxu0 %v776
        %828 = vmatprep.subr.bf16.mxu0 0
        %829 = vmatpush1.bf16.msra.mxu0 %v775
        %830 = vmatprep.subr.bf16.mxu0 0
        %831 = vmatpush1.bf16.msra.mxu0 %v774
        %832 = vmatprep.subr.bf16.mxu0 0
        %833 = vmatpush1.bf16.msra.mxu0 %v773
        %834 = vmatprep.subr.bf16.mxu0 0
        %835 = vmatpush1.bf16.msra.mxu0 %v772
        %836 = vmatprep.subr.bf16.mxu0 0
        %837 = vmatpush2.bf16.msra.mxu0 %v787
        %838 = vmatprep.subr.bf16.mxu0 0
        %839 = vmatpush2.bf16.msra.mxu0 %v786
        %840 = vmatprep.subr.bf16.mxu0 0
        %841 = vmatpush2.bf16.msra.mxu0 %v785
        %842 = vmatprep.subr.bf16.mxu0 0
        %843 = vmatpush2.bf16.msra.mxu0 %v784
        %844 = vmatprep.subr.bf16.mxu0 0
        %845 = vmatpush2.bf16.msra.mxu0 %v783
        %846 = vmatprep.subr.bf16.mxu0 0
        %847 = vmatpush2.bf16.msra.mxu0 %v782
        %848 = vmatprep.subr.bf16.mxu0 0
        %849 = vmatpush2.bf16.msra.mxu0 %v781
        %850 = vmatprep.subr.bf16.mxu0 0
        %851 = vmatpush2.bf16.msra.mxu0 %v780
        %852 = vmatprep.mubr.bf16.mxu0 %v629
        %853 = vmatmul.mubr.bf16.gmra.mxu0 %v628
        %v854 = vpop.f32.mrf.mxu0
        %v855 = vadd.f32 0.0, %v854
        %v856 = vpop.f32.mrf.mxu0
        %v857 = vpop.f32.mrf.mxu0
        %v858 = vadd.f32 0.0, %v857
        %v859 = vpop.f32.mrf.mxu0
        %860 = vmatprep.mubr.bf16.mxu0 %v632
        %861 = vmatmul.mubr.bf16.gmra.mxu0 %v631
        %v862 = vpop.f32.mrf.mxu0
        %v863 = vadd.f32 0.0, %v862
        %v864 = vpop.f32.mrf.mxu0
        %v865 = vpop.f32.mrf.mxu0
        %v866 = vadd.f32 0.0, %v865
        %v867 = vpop.f32.mrf.mxu0
        %868 = vmatprep.mubr.bf16.mxu0 %v635
        %869 = vmatmul.mubr.bf16.gmra.mxu0 %v634
        %v870 = vpop.f32.mrf.mxu0
        %v871 = vadd.f32 0.0, %v870
        %v872 = vpop.f32.mrf.mxu0
        %v873 = vpop.f32.mrf.mxu0
        %v874 = vadd.f32 0.0, %v873
        %v875 = vpop.f32.mrf.mxu0
        %876 = vmatprep.mubr.bf16.mxu0 %v638
        %877 = vmatmul.mubr.bf16.gmra.mxu0 %v637
        %v878 = vpop.f32.mrf.mxu0
        %v879 = vadd.f32 0.0, %v878
        %v880 = vpop.f32.mrf.mxu0
        %v881 = vpop.f32.mrf.mxu0
        %v882 = vadd.f32 0.0, %v881
        %v883 = vpop.f32.mrf.mxu0
        %884 = vmatprep.mubr.bf16.mxu0 %v641
        %885 = vmatmul.mubr.bf16.gmra.mxu0 %v640
        %v886 = vpop.f32.mrf.mxu0
        %v887 = vadd.f32 0.0, %v886
        %v888 = vpop.f32.mrf.mxu0
        %v889 = vpop.f32.mrf.mxu0
        %v890 = vadd.f32 0.0, %v889
        %v891 = vpop.f32.mrf.mxu0
        %892 = vmatprep.mubr.bf16.mxu0 %v644
        %893 = vmatmul.mubr.bf16.gmra.mxu0 %v643
        %v894 = vpop.f32.mrf.mxu0
        %v895 = vadd.f32 0.0, %v894
        %v896 = vpop.f32.mrf.mxu0
        %v897 = vpop.f32.mrf.mxu0
        %v898 = vadd.f32 0.0, %v897
        %v899 = vpop.f32.mrf.mxu0
        %900 = vmatprep.mubr.bf16.mxu0 %v647
        %901 = vmatmul.mubr.bf16.gmra.mxu0 %v646
        %v902 = vpop.f32.mrf.mxu0
        %v903 = vadd.f32 0.0, %v902
        %v904 = vpop.f32.mrf.mxu0
        %v905 = vpop.f32.mrf.mxu0
        %v906 = vadd.f32 0.0, %v905
        %v907 = vpop.f32.mrf.mxu0
        %908 = vmatprep.mubr.bf16.mxu0 %v650
        %909 = vmatmul.mubr.bf16.gmra.mxu0 %v649
        %v910 = vpop.f32.mrf.mxu0
        %v911 = vadd.f32 0.0, %v910
        %v912 = vpop.f32.mrf.mxu0
        %v913 = vpop.f32.mrf.mxu0
        %v914 = vadd.f32 0.0, %v913
        %v915 = vpop.f32.mrf.mxu0
        %916 = vdwg.mxu0
        %917 = vmatprep.subr.bf16.mxu0 0
        %918 = vmatpush1.bf16.msra.mxu0 %v795
        %919 = vmatprep.subr.bf16.mxu0 0
        %920 = vmatpush1.bf16.msra.mxu0 %v794
        %921 = vmatprep.subr.bf16.mxu0 0
        %922 = vmatpush1.bf16.msra.mxu0 %v793
        %923 = vmatprep.subr.bf16.mxu0 0
        %924 = vmatpush1.bf16.msra.mxu0 %v792
        %925 = vmatprep.subr.bf16.mxu0 0
        %926 = vmatpush1.bf16.msra.mxu0 %v791
        %927 = vmatprep.subr.bf16.mxu0 0
        %928 = vmatpush1.bf16.msra.mxu0 %v790
        %929 = vmatprep.subr.bf16.mxu0 0
        %930 = vmatpush1.bf16.msra.mxu0 %v789
        %931 = vmatprep.subr.bf16.mxu0 0
        %932 = vmatpush1.bf16.msra.mxu0 %v788
        %933 = vmatprep.subr.bf16.mxu0 0
        %934 = vmatpush2.bf16.msra.mxu0 0
        %935 = vmatprep.subr.bf16.mxu0 0
        %936 = vmatpush2.bf16.msra.mxu0 0
        %937 = vmatprep.subr.bf16.mxu0 0
        %938 = vmatpush2.bf16.msra.mxu0 0
        %939 = vmatprep.subr.bf16.mxu0 0
        %940 = vmatpush2.bf16.msra.mxu0 0
        %941 = vmatprep.subr.bf16.mxu0 0
        %942 = vmatpush2.bf16.msra.mxu0 0
        %943 = vmatprep.subr.bf16.mxu0 0
        %944 = vmatpush2.bf16.msra.mxu0 0
        %945 = vmatprep.subr.bf16.mxu0 0
        %946 = vmatpush2.bf16.msra.mxu0 0
        %947 = vmatprep.subr.bf16.mxu0 0
        %948 = vmatpush2.bf16.msra.mxu0 0
        %949 = vmatprep.mubr.bf16.mxu0 0
        %950 = vmatmul.mubr.bf16.gmra.mxu0 %v630
        %v951 = vpop.f32.mrf.mxu0
        %v952 = vadd.f32 %v855, %v951
        %v953 = vpop.f32.mrf.mxu0
        %v954 = vpop.f32.mrf.mxu0
        %v955 = vadd.f32 %v858, %v954
        %v956 = vpop.f32.mrf.mxu0
        %957 = vmatprep.mubr.bf16.mxu0 0
        %958 = vmatmul.mubr.bf16.gmra.mxu0 %v633
        %v959 = vpop.f32.mrf.mxu0
        %v960 = vadd.f32 %v863, %v959
        %v961 = vpop.f32.mrf.mxu0
        %v962 = vpop.f32.mrf.mxu0
        %v963 = vadd.f32 %v866, %v962
        %v964 = vpop.f32.mrf.mxu0
        %965 = vmatprep.mubr.bf16.mxu0 0
        %966 = vmatmul.mubr.bf16.gmra.mxu0 %v636
        %v967 = vpop.f32.mrf.mxu0
        %v968 = vadd.f32 %v871, %v967
        %v969 = vpop.f32.mrf.mxu0
        %v970 = vpop.f32.mrf.mxu0
        %v971 = vadd.f32 %v874, %v970
        %v972 = vpop.f32.mrf.mxu0
        %973 = vmatprep.mubr.bf16.mxu0 0
        %974 = vmatmul.mubr.bf16.gmra.mxu0 %v639
        %v975 = vpop.f32.mrf.mxu0
        %v976 = vadd.f32 %v879, %v975
        %v977 = vpop.f32.mrf.mxu0
        %v978 = vpop.f32.mrf.mxu0
        %v979 = vadd.f32 %v882, %v978
        %v980 = vpop.f32.mrf.mxu0
        %981 = vmatprep.mubr.bf16.mxu0 0
        %982 = vmatmul.mubr.bf16.gmra.mxu0 %v642
        %v983 = vpop.f32.mrf.mxu0
        %v984 = vadd.f32 %v887, %v983
        %v985 = vpop.f32.mrf.mxu0
        %v986 = vpop.f32.mrf.mxu0
        %v987 = vadd.f32 %v890, %v986
        %v988 = vpop.f32.mrf.mxu0
        %989 = vmatprep.mubr.bf16.mxu0 0
        %990 = vmatmul.mubr.bf16.gmra.mxu0 %v645
        %v991 = vpop.f32.mrf.mxu0
        %v992 = vadd.f32 %v895, %v991
        %v993 = vpop.f32.mrf.mxu0
        %v994 = vpop.f32.mrf.mxu0
        %v995 = vadd.f32 %v898, %v994
        %v996 = vpop.f32.mrf.mxu0
        %997 = vmatprep.mubr.bf16.mxu0 0
        %998 = vmatmul.mubr.bf16.gmra.mxu0 %v648
        %v999 = vpop.f32.mrf.mxu0
        %v1000 = vadd.f32 %v903, %v999
        %v1001 = vpop.f32.mrf.mxu0
        %v1002 = vpop.f32.mrf.mxu0
        %v1003 = vadd.f32 %v906, %v1002
        %v1004 = vpop.f32.mrf.mxu0
        %1005 = vmatprep.mubr.bf16.mxu0 0
        %1006 = vmatmul.mubr.bf16.gmra.mxu0 %v651
        %v1007 = vpop.f32.mrf.mxu0
        %v1008 = vadd.f32 %v911, %v1007
        %v1009 = vpop.f32.mrf.mxu0
        %v1010 = vpop.f32.mrf.mxu0
        %v1011 = vadd.f32 %v914, %v1010
        %v1012 = vpop.f32.mrf.mxu0
        %1013 = vdwg.mxu0
        %v1014 = vadd.f32 %v452, %v952
        %v1015 = vadd.f32 %v453, %v955
        %v1016 = vadd.f32 %v454, %v960
        %v1017 = vadd.f32 %v455, %v963
        %v1018 = vadd.f32 %v456, %v968
        %v1019 = vadd.f32 %v457, %v971
        %v1020 = vadd.f32 %v458, %v976
        %v1021 = vadd.f32 %v459, %v979
        %v1022 = vadd.f32 %v460, %v984
        %v1023 = vadd.f32 %v461, %v987
        %v1024 = vadd.f32 %v462, %v992
        %v1025 = vadd.f32 %v463, %v995
        %v1026 = vadd.f32 %v464, %v1000
        %v1027 = vadd.f32 %v465, %v1003
        %v1028 = vadd.f32 %v466, %v1008
        %v1029 = vadd.f32 %v467, %v1011
        %1030 = vst [vmem:[#allocation2] sm:$0xff] %v1014
        %1031 = vst [vmem:[#allocation2 + $0x8] sm:$0xff] %v1015
        %1032 = vst [vmem:[#allocation2 + $0x10] sm:$0xff] %v1016
        %1033 = vst [vmem:[#allocation2 + $0x18] sm:$0xff] %v1017
        %1034 = vst [vmem:[#allocation2 + $0x20] sm:$0xff] %v1018
        %1035 = vst [vmem:[#allocation2 + $0x28] sm:$0xff] %v1019
        %1036 = vst [vmem:[#allocation2 + $0x30] sm:$0xff] %v1020
        %1037 = vst [vmem:[#allocation2 + $0x38] sm:$0xff] %v1021
        %1038 = vst [vmem:[#allocation2 + $0x40] sm:$0xff] %v1022
        %1039 = vst [vmem:[#allocation2 + $0x48] sm:$0xff] %v1023
        %1040 = vst [vmem:[#allocation2 + $0x50] sm:$0xff] %v1024
        %1041 = vst [vmem:[#allocation2 + $0x58] sm:$0xff] %v1025
        %1042 = vst [vmem:[#allocation2 + $0x60] sm:$0xff] %v1026
        %1043 = vst [vmem:[#allocation2 + $0x68] sm:$0xff] %v1027
        %1044 = vst [vmem:[#allocation2 + $0x70] sm:$0xff] %v1028
        %1045 = vst [vmem:[#allocation2 + $0x78] sm:$0xff] %v1029
        %p1046 = scmp.eq.s32.totalorder %s24, 2
        // Predicated region
        $region71: #{residual_block_forward.5} parent=61 // pred_check
          %p1047 = pneg %p1046
        $region72: #{residual_block_forward.5} parent=61 // pred_check_branch
          %1049 = sbr.rel (%p1047) target = $region74
        $region73: #{residual_block_forward.5} parent=61 // pred_region
          %v1050 = vld [vmem:[#allocation2] sm:$0xff]
          %v1051 = vld [vmem:[#allocation2 + $0x8] sm:$0xff]
          %v1052 = vld [vmem:[#allocation2 + $0x10] sm:$0xff]
          %v1053 = vld [vmem:[#allocation2 + $0x18] sm:$0xff]
          %v1054 = vld [vmem:[#allocation2 + $0x20] sm:$0xff]
          %v1055 = vld [vmem:[#allocation2 + $0x28] sm:$0xff]
          %v1056 = vld [vmem:[#allocation2 + $0x30] sm:$0xff]
          %v1057 = vld [vmem:[#allocation2 + $0x38] sm:$0xff]
          %v1058 = vld [vmem:[#allocation2 + $0x40] sm:$0xff]
          %v1059 = vld [vmem:[#allocation2 + $0x48] sm:$0xff]
          %v1060 = vld [vmem:[#allocation2 + $0x50] sm:$0xff]
          %v1061 = vld [vmem:[#allocation2 + $0x58] sm:$0xff]
          %v1062 = vld [vmem:[#allocation2 + $0x60] sm:$0xff]
          %v1063 = vld [vmem:[#allocation2 + $0x68] sm:$0xff]
          %v1064 = vld [vmem:[#allocation2 + $0x70] sm:$0xff]
          %v1065 = vld [vmem:[#allocation2 + $0x78] sm:$0xff]
          %v1066 = vld [vmem:[%s417] sm:$0x1]
          %v1068 = vlaneseq
          %v1069 = vshrl.u32 %v1068, 7
          %v1070 = vsub.s32 0, %v1069
          %v1071 = vrot.slane %v1066, %v1070
          %v1073 = vmul.f32 %v1050, %v1071
          %v1074 = vmul.f32 %v1051, %v1071
          %v1075 = vmul.f32 %v1052, %v1071
          %v1076 = vmul.f32 %v1053, %v1071
          %v1077 = vmul.f32 %v1054, %v1071
          %v1078 = vmul.f32 %v1055, %v1071
          %v1079 = vmul.f32 %v1056, %v1071
          %v1080 = vmul.f32 %v1057, %v1071
          %v1081 = vmul.f32 %v1058, %v1071
          %v1082 = vmul.f32 %v1059, %v1071
          %v1083 = vmul.f32 %v1060, %v1071
          %v1084 = vmul.f32 %v1061, %v1071
          %v1085 = vmul.f32 %v1062, %v1071
          %v1086 = vmul.f32 %v1063, %v1071
          %v1087 = vmul.f32 %v1064, %v1071
          %v1088 = vmul.f32 %v1065, %v1071
          %v1089 = vld [vmem:[%s420] sm:$0x1]
          %v1091 = vlaneseq
          %v1092 = vshrl.u32 %v1091, 7
          %v1093 = vsub.s32 0, %v1092
          %v1094 = vrot.slane %v1089, %v1093
          %v1096 = vadd.f32 %v1073, %v1094
          %v1097 = vadd.f32 %v1074, %v1094
          %v1098 = vadd.f32 %v1075, %v1094
          %v1099 = vadd.f32 %v1076, %v1094
          %v1100 = vadd.f32 %v1077, %v1094
          %v1101 = vadd.f32 %v1078, %v1094
          %v1102 = vadd.f32 %v1079, %v1094
          %v1103 = vadd.f32 %v1080, %v1094
          %v1104 = vadd.f32 %v1081, %v1094
          %v1105 = vadd.f32 %v1082, %v1094
          %v1106 = vadd.f32 %v1083, %v1094
          %v1107 = vadd.f32 %v1084, %v1094
          %v1108 = vadd.f32 %v1085, %v1094
          %v1109 = vadd.f32 %v1086, %v1094
          %v1110 = vadd.f32 %v1087, %v1094
          %v1111 = vadd.f32 %v1088, %v1094
          %v1112 = vld [vmem:[%s428] sm:$0xf]
          %v1113 = vld [vmem:[%s428 + $0x4] sm:$0xf]
          %v1114 = vld [vmem:[%s428 + $0x8] sm:$0xf]
          %v1115 = vld [vmem:[%s428 + $0xc] sm:$0xf]
          %v1116 = vld [vmem:[%s428 + $0x10] sm:$0xf]
          %v1117 = vld [vmem:[%s428 + $0x14] sm:$0xf]
          %v1118 = vld [vmem:[%s428 + $0x18] sm:$0xf]
          %v1119 = vld [vmem:[%s428 + $0x1c] sm:$0xf]
          %v1120 = vld [vmem:[%s428 + $0x20] sm:$0xf]
          %v1121 = vld [vmem:[%s428 + $0x24] sm:$0xf]
          %v1122 = vld [vmem:[%s428 + $0x28] sm:$0xf]
          %v1123 = vld [vmem:[%s428 + $0x2c] sm:$0xf]
          %v1124 = vld [vmem:[%s428 + $0x30] sm:$0xf]
          %v1125 = vld [vmem:[%s428 + $0x34] sm:$0xf]
          %v1126 = vld [vmem:[%s428 + $0x38] sm:$0xf]
          %v1127 = vld [vmem:[%s428 + $0x3c] sm:$0xf]
          %v1128 = vunpack.c.l.bf16 %v1112
          %v1129 = vunpack.c.l.bf16 %v1113
          %v1130 = vunpack.c.l.bf16 %v1114
          %v1131 = vunpack.c.l.bf16 %v1115
          %v1132 = vunpack.c.l.bf16 %v1116
          %v1133 = vunpack.c.l.bf16 %v1117
          %v1134 = vunpack.c.l.bf16 %v1118
          %v1135 = vunpack.c.l.bf16 %v1119
          %v1136 = vunpack.c.l.bf16 %v1120
          %v1137 = vunpack.c.l.bf16 %v1121
          %v1138 = vunpack.c.l.bf16 %v1122
          %v1139 = vunpack.c.l.bf16 %v1123
          %v1140 = vunpack.c.l.bf16 %v1124
          %v1141 = vunpack.c.l.bf16 %v1125
          %v1142 = vunpack.c.l.bf16 %v1126
          %v1143 = vunpack.c.l.bf16 %v1127
          %v1144 = vadd.f32 %v1096, %v1128
          %v1145 = vadd.f32 %v1097, %v1129
          %v1146 = vadd.f32 %v1098, %v1130
          %v1147 = vadd.f32 %v1099, %v1131
          %v1148 = vadd.f32 %v1100, %v1132
          %v1149 = vadd.f32 %v1101, %v1133
          %v1150 = vadd.f32 %v1102, %v1134
          %v1151 = vadd.f32 %v1103, %v1135
          %v1152 = vadd.f32 %v1104, %v1136
          %v1153 = vadd.f32 %v1105, %v1137
          %v1154 = vadd.f32 %v1106, %v1138
          %v1155 = vadd.f32 %v1107, %v1139
          %v1156 = vadd.f32 %v1108, %v1140
          %v1157 = vadd.f32 %v1109, %v1141
          %v1158 = vadd.f32 %v1110, %v1142
          %v1159 = vadd.f32 %v1111, %v1143
          %v1160 = vmax.f32 %v1144, 0.0
          %v1161 = vmax.f32 %v1145, 0.0
          %v1162 = vmax.f32 %v1146, 0.0
          %v1163 = vmax.f32 %v1147, 0.0
          %v1164 = vmax.f32 %v1148, 0.0
          %v1165 = vmax.f32 %v1149, 0.0
          %v1166 = vmax.f32 %v1150, 0.0
          %v1167 = vmax.f32 %v1151, 0.0
          %v1168 = vmax.f32 %v1152, 0.0
          %v1169 = vmax.f32 %v1153, 0.0
          %v1170 = vmax.f32 %v1154, 0.0
          %v1171 = vmax.f32 %v1155, 0.0
          %v1172 = vmax.f32 %v1156, 0.0
          %v1173 = vmax.f32 %v1157, 0.0
          %v1174 = vmax.f32 %v1158, 0.0
          %v1175 = vmax.f32 %v1159, 0.0
          %1176 = vst [vmem:[#allocation4] sm:$0xff] %v1160
          %1177 = vst [vmem:[#allocation4 + $0x8] sm:$0xff] %v1161
          %1178 = vst [vmem:[#allocation4 + $0x10] sm:$0xff] %v1162
          %1179 = vst [vmem:[#allocation4 + $0x18] sm:$0xff] %v1163
          %1180 = vst [vmem:[#allocation4 + $0x20] sm:$0xff] %v1164
          %1181 = vst [vmem:[#allocation4 + $0x28] sm:$0xff] %v1165
          %1182 = vst [vmem:[#allocation4 + $0x30] sm:$0xff] %v1166
          %1183 = vst [vmem:[#allocation4 + $0x38] sm:$0xff] %v1167
          %1184 = vst [vmem:[#allocation4 + $0x40] sm:$0xff] %v1168
          %1185 = vst [vmem:[#allocation4 + $0x48] sm:$0xff] %v1169
          %1186 = vst [vmem:[#allocation4 + $0x50] sm:$0xff] %v1170
          %1187 = vst [vmem:[#allocation4 + $0x58] sm:$0xff] %v1171
          %1188 = vst [vmem:[#allocation4 + $0x60] sm:$0xff] %v1172
          %1189 = vst [vmem:[#allocation4 + $0x68] sm:$0xff] %v1173
          %1190 = vst [vmem:[#allocation4 + $0x70] sm:$0xff] %v1174
          %1191 = vst [vmem:[#allocation4 + $0x78] sm:$0xff] %v1175
        $region74: #{residual_block_forward.5} parent=61 // pred_fallthru
          _
        // Predicated region
        $region75: #{residual_block_forward.5} parent=61 // pred_check
          %p1192 = pneg %p192
        $region76: #{residual_block_forward.5} parent=61 // pred_check_branch
          %1194 = sbr.rel (%p1192) target = $region78
        $region77: #{residual_block_forward.5} parent=61 // pred_region
          %s1195 = smul.u32 16, %s22
          %s1197 = ssub.s32 2048, 2048
          %1198 = vsyncadd [#allocation5], %s1197
          %s1199 = sadd.s32 %s23, %s1195
          %s1200 = smul.addr %s1199, 128
          %s1201 = scalar_lea.hbm %s5, %s1200
          %s1202 = sshll.u32 [#allocation4], 4
          %s1203 = int_to_ptr.vmem [resolvable:$true] %s1202
          %1208 = dma.vmem_to_hbm [thread:$0]  %s1203, 2048, %s1201, [#allocation5], 128, 128, 8
        $region78: #{residual_block_forward.5} parent=61 // pred_fallthru
          _
        // Predicated region
        $region79: #{residual_block_forward.5} parent=61 // pred_check
          %p1209 = pneg %p192
        $region80: #{residual_block_forward.5} parent=61 // pred_check_branch
          %1211 = sbr.rel (%p1209) target = $region82
        $region81: #{residual_block_forward.5} parent=61 // pred_region
          %1212 = dma.done [#allocation5], 2048
        $region82: #{residual_block_forward.5} parent=61 // pred_fallthru
          _
      $region62: #{residual_block_forward.5} parent=5 // pred_fallthru
        _
      %p1213 = scmp.le.s32.totalorder 2, %s12
      // Predicated region
      $region83: #{residual_block_forward.5} parent=5 // pred_check
        %p1214 = pneg %p1213
      $region84: #{residual_block_forward.5} parent=5 // pred_check_branch
        %1216 = sbr.rel (%p1214) target = $region86
      $region85: #{residual_block_forward.5} parent=5 // pred_region
        %s1217 = ssub.s32 %s12, 2
      $region86: #{residual_block_forward.5} parent=5 // pred_fallthru
        _
    $region6: #{residual_block_forward.5} parent=1 // loop_footer
      %s16 = sadd.s32 1, %s12
    $region7: #{residual_block_forward.5} parent=1 // loop_footer_branch
      %11 = sbr.rel target = $region3
    $region8: #{residual_block_forward.5} parent=1 // loop_exit
      _
    %1218 = vsyncpa [#allocation5], 1
    %s1219 = scalar_lea.sflag [#allocation5], 1
    %1220 = vsyncpa %s1219, 1

</llo_original>
